<compile_context>
chip_gen: v7x
topology: tpu7x:2x2x1
jax: 0.10.0
libtpu: 0.0.40
codegen_flags: <defaults>
</compile_context>

<pallas_src>
import jax
import jax.numpy as jnp
from jax.experimental import pallas as pl
from jax.experimental.pallas import tpu as pltpu  # noqa: F401  (kept for TPU-specific extensions)

INPUT_DIM = 28 * 28   # 784, fixed by the module
H_DIM = 16
Z_DIM = 2
NUM_SAMPLES = 20      # module default


# ----------------------------------------------------------------------------
# Fused kernel: encode -> reparameterize (all S at once) -> decode
# ----------------------------------------------------------------------------
def _iwae_kernel(x_ref, eps_ref, rep_ref,
                 w1, b1, w2, b2,
                 wh, bh,                 # fused enc_w3 @ [fc1|fc2]  : (64, 2Z)
                 wz, bz,                 # fused fc3 @ dec_w1 (f32)  : (Z, 64)
                 wd2, bd2, wd3, bd3,
                 mulv_ref, out_ref):
    """x: (B, 784) f32, eps: (S*B, Z) f32 (row = s*B + b),
    rep: (S*B, B) f32 constant replication matrix (row r selects batch r % B).
    MXU weights bf16, everything else f32."""

    def mm(a, w_ref):
        # bf16 MXU matmul with f32 accumulation.
        return jnp.dot(a.astype(jnp.bfloat16), w_ref[...],
                       preferred_element_type=jnp.float32)

    # ---- encoder: 784 -> 256 -> 64 -> [mu | logvar] (fused head) ----
    x = x_ref[...]                                            # (B, 784) f32
    h = jnp.maximum(mm(x, w1) + b1[...], 0.0)                 # (B, 256)
    h = jnp.maximum(mm(h, w2) + b2[...], 0.0)                 # (B, 64)
    mulv = mm(h, wh) + bh[...]                                # (B, 2Z)
    mulv_ref[...] = mulv

    # ---- replicate per-batch stats over the S samples, in registers ----
    # rep is a 0/1 tile of eye(B): mulv_rep[r] == mulv[r % B] exactly.
    # (one tiny f32 dot instead of S masked sub-tile scratch stores)
    mulv_rep = jnp.dot(rep_ref[...], mulv,
                       preferred_element_type=jnp.float32)    # (S*B, 2Z)
    mu_rep = mulv_rep[:, :Z_DIM]                              # (S*B, Z)
    std_rep = jnp.exp(0.5 * mulv_rep[:, Z_DIM:])              # (S*B, Z)

    z = mu_rep + std_rep * eps_ref[...]                       # (S*B, Z)

    # ---- decoder entry (fused fc3 + Linear(16,64)), K = Z = 2 -> VPU ----
    # Two broadcast FMAs instead of a degenerate K=2 MXU pass.
    wzm = wz[...]                                             # (Z, 64) f32
    d = bz[...]                                               # (1, 64) f32
    for j in range(Z_DIM):
        d = d + z[:, j:j + 1] * wzm[j:j + 1, :]               # (S*B, 64)
    d = jnp.maximum(d, 0.0)

    # ---- decoder tail, run once with M = S*B: 64 -> 256 -> 784 ----
    d = jnp.maximum(mm(d, wd2) + bd2[...], 0.0)               # (S*B, 256)
    logits = mm(d, wd3) + bd3[...]                            # (S*B, 784)

    # sigmoid via a single EUP tanh; stays exactly in [0, 1].
    out_ref[...] = 0.5 * (jnp.tanh(0.5 * logits) + 1.0)


# ----------------------------------------------------------------------------
# Wrapper
# ----------------------------------------------------------------------------
def _full_spec(shape):
    """Whole-array block (no grid); constant index map."""
    return pl.BlockSpec(shape, lambda *_: (0,) * len(shape))


def prepare_params(raw):
    """Compose activation-free layer pairs (in f32) and set kernel dtypes."""
    def row(b):
        return b.reshape(1, -1).astype(jnp.float32)

    # encoder head: enc_w3 (64,16) composed with [fc1 | fc2] (16, 2Z)
    wheads = jnp.concatenate([raw["fc1_w"], raw["fc2_w"]], axis=1)       # (H, 2Z)
    bheads = jnp.concatenate([raw["fc1_b"], raw["fc2_b"]], axis=0)       # (2Z,)
    wh = raw["enc_w3"] @ wheads                                          # (64, 2Z)
    bh = raw["enc_b3"] @ wheads + bheads                                 # (2Z,)

    # decoder entry: fc3 (Z,16) composed with decoder Linear(16,64)
    wz = raw["fc3_w"] @ raw["dec_w1"]                                    # (Z, 64)
    bz = raw["fc3_b"] @ raw["dec_w1"] + raw["dec_b1"]                    # (64,)

    return dict(
        w1=raw["enc_w1"].astype(jnp.bfloat16), b1=row(raw["enc_b1"]),
        w2=raw["enc_w2"].astype(jnp.bfloat16), b2=row(raw["enc_b2"]),
        wh=wh.astype(jnp.bfloat16),            bh=row(bh),
        wz=wz.astype(jnp.float32),             bz=row(bz),   # VPU layer: f32
        wd2=raw["dec_w2"].astype(jnp.bfloat16), bd2=row(raw["dec_b2"]),
        wd3=raw["dec_w3"].astype(jnp.bfloat16), bd3=row(raw["dec_b3"]),
    )


def iwae_forward(x, p, eps):
    """x: (B, 784) f32; eps: (S, B, Z) f32 (pre-sampled reparam noise).

    Returns (outputs, mu, logvar) with outputs shaped (S, B, 784);
    outputs[s] is the reconstruction for importance sample s.
    """
    B = x.shape[0]
    S = eps.shape[0]
    eps_flat = eps.reshape(S * B, Z_DIM)            # row s*B + b  <->  eps[s, b]
    # Constant 0/1 replication matrix: row r selects batch row (r % B).
    rep = jnp.tile(jnp.eye(B, dtype=jnp.float32), (S, 1))     # (S*B, B)

    weight_args = (p["w1"], p["b1"], p["w2"], p["b2"],
                   p["wh"], p["bh"], p["wz"], p["bz"],
                   p["wd2"], p["bd2"], p["wd3"], p["bd3"])
    args = (x, eps_flat, rep) + weight_args

    mulv, out_flat = pl.pallas_call(
        _iwae_kernel,
        out_shape=(jax.ShapeDtypeStruct((B, 2 * Z_DIM), jnp.float32),
                   jax.ShapeDtypeStruct((S * B, INPUT_DIM), jnp.float32)),
        in_specs=[_full_spec(a.shape) for a in args],
        out_specs=(_full_spec((B, 2 * Z_DIM)),
                   _full_spec((S * B, INPUT_DIM))),
    )(*args)

    mu = mulv[:, :Z_DIM]
    logvar = mulv[:, Z_DIM:]
    outputs = out_flat.reshape(S, B, INPUT_DIM)     # free: row s*B+b == [s, b]
    return outputs, mu, logvar


# ----------------------------------------------------------------------------
# Deterministic parameter init (synthetic weights matching the module shapes)
# ----------------------------------------------------------------------------
def init_raw_params(key):
    def linear(k, fan_in, fan_out):
        kw, kb = jax.random.split(k)
        bound = 1.0 / jnp.sqrt(float(fan_in))
        w = jax.random.uniform(kw, (fan_in, fan_out), jnp.float32, -bound, bound)
        b = jax.random.uniform(kb, (fan_out,), jnp.float32, -bound, bound)
        return w, b

    keys = jax.random.split(key, 9)
    raw = {}
    raw["enc_w1"], raw["enc_b1"] = linear(keys[0], INPUT_DIM, 256)
    raw["enc_w2"], raw["enc_b2"] = linear(keys[1], 256, 64)
    raw["enc_w3"], raw["enc_b3"] = linear(keys[2], 64, H_DIM)
    raw["fc1_w"], raw["fc1_b"] = linear(keys[3], H_DIM, Z_DIM)   # mu head
    raw["fc2_w"], raw["fc2_b"] = linear(keys[4], H_DIM, Z_DIM)   # logvar head
    raw["fc3_w"], raw["fc3_b"] = linear(keys[5], Z_DIM, H_DIM)
    raw["dec_w1"], raw["dec_b1"] = linear(keys[6], H_DIM, 64)
    raw["dec_w2"], raw["dec_b2"] = linear(keys[7], 64, 256)
    raw["dec_w3"], raw["dec_b3"] = linear(keys[8], 256, INPUT_DIM)
    return raw


# ----------------------------------------------------------------------------
# Pure-JAX reference using the same prepared (composed, bf16) weights and the
# same math as the kernel -- mirrors the original module's forward structure:
# encode -> bottleneck -> reparameterize per sample -> decode per sample.
# ----------------------------------------------------------------------------
def reference_forward(x, p, eps):
    def mm(a, w):
        return jnp.dot(a.astype(jnp.bfloat16), w,
                       preferred_element_type=jnp.float32)

    h = jnp.maximum(mm(x, p["w1"]) + p["b1"], 0.0)
    h = jnp.maximum(mm(h, p["w2"]) + p["b2"], 0.0)
    mulv = mm(h, p["wh"]) + p["bh"]
    mu, logvar = mulv[:, :Z_DIM], mulv[:, Z_DIM:]
    std = jnp.exp(0.5 * logvar)
    outs = []
    for s in range(eps.shape[0]):
        z = mu + std * eps[s]
        d = jnp.maximum(z @ p["wz"] + p["bz"], 0.0)
        d = jnp.maximum(mm(d, p["wd2"]) + p["bd2"], 0.0)
        logits = mm(d, p["wd3"]) + p["bd3"]
        outs.append(0.5 * (jnp.tanh(0.5 * logits) + 1.0))
    return jnp.stack(outs, axis=0), mu, logvar


if __name__ == "__main__":
    key = jax.random.PRNGKey(0)
    k_param, k_x, k_eps = jax.random.split(key, 3)

    B = 2
    raw = init_raw_params(k_param)
    params = prepare_params(raw)
    x = jax.random.uniform(k_x, (B, INPUT_DIM), jnp.float32)          # "images"
    # Pre-sampled reparameterization noise (torch.randn equivalent, deterministic).
    eps = jax.random.normal(k_eps, (NUM_SAMPLES, B, Z_DIM), jnp.float32)

    outputs, mu, logvar = iwae_forward(x, params, eps)
    jax.block_until_ready(outputs)
    jax.block_until_ready(mu)
    jax.block_until_ready(logvar)

    # sanity check against the pure-JAX reference (same weights / precision)
    ref_outs, ref_mu, ref_lv = reference_forward(x, params, eps)
    assert mu.shape == (B, Z_DIM) and logvar.shape == (B, Z_DIM)
    assert outputs.shape == (NUM_SAMPLES, B, INPUT_DIM)
    assert jnp.allclose(mu, ref_mu, atol=1e-3, rtol=1e-3)
    assert jnp.allclose(logvar, ref_lv, atol=1e-3, rtol=1e-3)
    # outputs may differ only by MXU accumulation order on the bf16 layers
    assert jnp.allclose(outputs, ref_outs, atol=1e-2, rtol=1e-2)
    assert float(outputs.min()) >= 0.0 and float(outputs.max()) <= 1.0

    print("KERNEL_OK")
</pallas_src>

<mosaic_0001>
module attributes {stable_mosaic.version = 11 : i64} {
  func.func @_iwae_kernel(%arg0: memref<2x784xf32, #tpu.memory_space<vmem>>, %arg1: memref<40x2xf32, #tpu.memory_space<vmem>>, %arg2: memref<40x2xf32, #tpu.memory_space<vmem>>, %arg3: memref<784x256xbf16, #tpu.memory_space<vmem>>, %arg4: memref<1x256xf32, #tpu.memory_space<vmem>>, %arg5: memref<256x64xbf16, #tpu.memory_space<vmem>>, %arg6: memref<1x64xf32, #tpu.memory_space<vmem>>, %arg7: memref<64x4xbf16, #tpu.memory_space<vmem>>, %arg8: memref<1x4xf32, #tpu.memory_space<vmem>>, %arg9: memref<2x64xf32, #tpu.memory_space<vmem>>, %arg10: memref<1x64xf32, #tpu.memory_space<vmem>>, %arg11: memref<64x256xbf16, #tpu.memory_space<vmem>>, %arg12: memref<1x256xf32, #tpu.memory_space<vmem>>, %arg13: memref<256x784xbf16, #tpu.memory_space<vmem>>, %arg14: memref<1x784xf32, #tpu.memory_space<vmem>>, %arg15: memref<2x4xf32, #tpu.memory_space<vmem>>, %arg16: memref<40x784xf32, #tpu.memory_space<vmem>>) attributes {dimension_semantics = [], scalar_prefetch = 0 : i64, scratch_operands = 0 : i64, tpu.core_type = #tpu.core_type<tc>} {
    %c0 = arith.constant 0 : index
    %c0_0 = arith.constant 0 : index
    %0 = vector.load %arg0[%c0, %c0_0] : memref<2x784xf32, #tpu.memory_space<vmem>>, vector<2x784xf32>
    %1 = arith.truncf %0 : vector<2x784xf32> to vector<2x784xbf16>
    %c0_1 = arith.constant 0 : index
    %c0_2 = arith.constant 0 : index
    %2 = vector.load %arg3[%c0_1, %c0_2] : memref<784x256xbf16, #tpu.memory_space<vmem>>, vector<784x256xbf16>
    %cst = arith.constant dense<0.000000e+00> : vector<2x256xf32>
    %3 = tpu.matmul %1, %2, %cst {dimension_numbers = #tpu.dot_dimension_numbers<[1], [0], [0], [1], [0, 0, 1, 1], [], []>} : vector<2x784xbf16>, vector<784x256xbf16>, vector<2x256xf32> -> vector<2x256xf32>
    %c0_3 = arith.constant 0 : index
    %c0_4 = arith.constant 0 : index
    %4 = vector.load %arg4[%c0_3, %c0_4] : memref<1x256xf32, #tpu.memory_space<vmem>>, vector<1x256xf32>
    %5 = vector.broadcast %4 : vector<1x256xf32> to vector<2x256xf32>
    %6 = arith.addf %3, %5 : vector<2x256xf32>
    %cst_5 = arith.constant 0.000000e+00 : f32
    %7 = vector.broadcast %cst_5 : f32 to vector<2x256xf32>
    %8 = arith.maximumf %6, %7 : vector<2x256xf32>
    %9 = arith.truncf %8 : vector<2x256xf32> to vector<2x256xbf16>
    %c0_6 = arith.constant 0 : index
    %c0_7 = arith.constant 0 : index
    %10 = vector.load %arg5[%c0_6, %c0_7] : memref<256x64xbf16, #tpu.memory_space<vmem>>, vector<256x64xbf16>
    %cst_8 = arith.constant dense<0.000000e+00> : vector<2x64xf32>
    %11 = tpu.matmul %9, %10, %cst_8 {dimension_numbers = #tpu.dot_dimension_numbers<[1], [0], [0], [1], [0, 0, 1, 1], [], []>} : vector<2x256xbf16>, vector<256x64xbf16>, vector<2x64xf32> -> vector<2x64xf32>
    %c0_9 = arith.constant 0 : index
    %c0_10 = arith.constant 0 : index
    %12 = vector.load %arg6[%c0_9, %c0_10] : memref<1x64xf32, #tpu.memory_space<vmem>>, vector<1x64xf32>
    %13 = vector.broadcast %12 : vector<1x64xf32> to vector<2x64xf32>
    %14 = arith.addf %11, %13 : vector<2x64xf32>
    %cst_11 = arith.constant 0.000000e+00 : f32
    %15 = vector.broadcast %cst_11 : f32 to vector<2x64xf32>
    %16 = arith.maximumf %14, %15 : vector<2x64xf32>
    %17 = arith.truncf %16 : vector<2x64xf32> to vector<2x64xbf16>
    %c0_12 = arith.constant 0 : index
    %c0_13 = arith.constant 0 : index
    %18 = vector.load %arg7[%c0_12, %c0_13] : memref<64x4xbf16, #tpu.memory_space<vmem>>, vector<64x4xbf16>
    %cst_14 = arith.constant dense<0.000000e+00> : vector<2x4xf32>
    %19 = tpu.matmul %17, %18, %cst_14 {dimension_numbers = #tpu.dot_dimension_numbers<[1], [0], [0], [1], [0, 0, 1, 1], [], []>} : vector<2x64xbf16>, vector<64x4xbf16>, vector<2x4xf32> -> vector<2x4xf32>
    %c0_15 = arith.constant 0 : index
    %c0_16 = arith.constant 0 : index
    %20 = vector.load %arg8[%c0_15, %c0_16] : memref<1x4xf32, #tpu.memory_space<vmem>>, vector<1x4xf32>
    %21 = vector.broadcast %20 : vector<1x4xf32> to vector<2x4xf32>
    %22 = arith.addf %19, %21 : vector<2x4xf32>
    %c0_17 = arith.constant 0 : index
    %c0_18 = arith.constant 0 : index
    %23 = vector.load %arg15[%c0_17, %c0_18] : memref<2x4xf32, #tpu.memory_space<vmem>>, vector<2x4xf32>
    tpu.vector_store %arg15[%c0_17, %c0_18], %22 {strides = array<i32>} : memref<2x4xf32, #tpu.memory_space<vmem>>, vector<2x4xf32>,
    %c0_19 = arith.constant 0 : index
    %c0_20 = arith.constant 0 : index
    %24 = vector.load %arg2[%c0_19, %c0_20] : memref<40x2xf32, #tpu.memory_space<vmem>>, vector<40x2xf32>
    %cst_21 = arith.constant dense<0.000000e+00> : vector<40x4xf32>
    %25 = tpu.matmul %24, %22, %cst_21 {dimension_numbers = #tpu.dot_dimension_numbers<[1], [0], [0], [1], [0, 0, 1, 1], [], []>} : vector<40x2xf32>, vector<2x4xf32>, vector<40x4xf32> -> vector<40x4xf32>
    %26 = vector.extract_strided_slice %25 {offsets = [0, 0], sizes = [40, 2], strides = [1, 1]} : vector<40x4xf32> to vector<40x2xf32>
    %27 = vector.extract_strided_slice %25 {offsets = [0, 2], sizes = [40, 2], strides = [1, 1]} : vector<40x4xf32> to vector<40x2xf32>
    %cst_22 = arith.constant 5.000000e-01 : f32
    %28 = vector.broadcast %cst_22 : f32 to vector<40x2xf32>
    %29 = arith.mulf %28, %27 : vector<40x2xf32>
    %30 = math.exp %29 : vector<40x2xf32>
    %c0_23 = arith.constant 0 : index
    %c0_24 = arith.constant 0 : index
    %31 = vector.load %arg1[%c0_23, %c0_24] : memref<40x2xf32, #tpu.memory_space<vmem>>, vector<40x2xf32>
    %32 = arith.mulf %30, %31 : vector<40x2xf32>
    %33 = arith.addf %26, %32 : vector<40x2xf32>
    %c0_25 = arith.constant 0 : index
    %c0_26 = arith.constant 0 : index
    %34 = vector.load %arg9[%c0_25, %c0_26] : memref<2x64xf32, #tpu.memory_space<vmem>>, vector<2x64xf32>
    %c0_27 = arith.constant 0 : index
    %c0_28 = arith.constant 0 : index
    %35 = vector.load %arg10[%c0_27, %c0_28] : memref<1x64xf32, #tpu.memory_space<vmem>>, vector<1x64xf32>
    %36 = vector.extract_strided_slice %33 {offsets = [0, 0], sizes = [40, 1], strides = [1, 1]} : vector<40x2xf32> to vector<40x1xf32>
    %37 = vector.extract_strided_slice %34 {offsets = [0, 0], sizes = [1, 64], strides = [1, 1]} : vector<2x64xf32> to vector<1x64xf32>
    %38 = vector.broadcast %36 : vector<40x1xf32> to vector<40x64xf32>
    %39 = vector.broadcast %37 : vector<1x64xf32> to vector<40x64xf32>
    %40 = arith.mulf %38, %39 : vector<40x64xf32>
    %41 = vector.broadcast %35 : vector<1x64xf32> to vector<40x64xf32>
    %42 = arith.addf %41, %40 : vector<40x64xf32>
    %43 = vector.extract_strided_slice %33 {offsets = [0, 1], sizes = [40, 1], strides = [1, 1]} : vector<40x2xf32> to vector<40x1xf32>
    %44 = vector.extract_strided_slice %34 {offsets = [1, 0], sizes = [1, 64], strides = [1, 1]} : vector<2x64xf32> to vector<1x64xf32>
    %45 = vector.broadcast %43 : vector<40x1xf32> to vector<40x64xf32>
    %46 = vector.broadcast %44 : vector<1x64xf32> to vector<40x64xf32>
    %47 = arith.mulf %45, %46 : vector<40x64xf32>
    %48 = arith.addf %42, %47 : vector<40x64xf32>
    %cst_29 = arith.constant 0.000000e+00 : f32
    %49 = vector.broadcast %cst_29 : f32 to vector<40x64xf32>
    %50 = arith.maximumf %48, %49 : vector<40x64xf32>
    %51 = arith.truncf %50 : vector<40x64xf32> to vector<40x64xbf16>
    %c0_30 = arith.constant 0 : index
    %c0_31 = arith.constant 0 : index
    %52 = vector.load %arg11[%c0_30, %c0_31] : memref<64x256xbf16, #tpu.memory_space<vmem>>, vector<64x256xbf16>
    %cst_32 = arith.constant dense<0.000000e+00> : vector<40x256xf32>
    %53 = tpu.matmul %51, %52, %cst_32 {dimension_numbers = #tpu.dot_dimension_numbers<[1], [0], [0], [1], [0, 0, 1, 1], [], []>} : vector<40x64xbf16>, vector<64x256xbf16>, vector<40x256xf32> -> vector<40x256xf32>
    %c0_33 = arith.constant 0 : index
    %c0_34 = arith.constant 0 : index
    %54 = vector.load %arg12[%c0_33, %c0_34] : memref<1x256xf32, #tpu.memory_space<vmem>>, vector<1x256xf32>
    %55 = vector.broadcast %54 : vector<1x256xf32> to vector<40x256xf32>
    %56 = arith.addf %53, %55 : vector<40x256xf32>
    %cst_35 = arith.constant 0.000000e+00 : f32
    %57 = vector.broadcast %cst_35 : f32 to vector<40x256xf32>
    %58 = arith.maximumf %56, %57 : vector<40x256xf32>
    %59 = arith.truncf %58 : vector<40x256xf32> to vector<40x256xbf16>
    %c0_36 = arith.constant 0 : index
    %c0_37 = arith.constant 0 : index
    %60 = vector.load %arg13[%c0_36, %c0_37] : memref<256x784xbf16, #tpu.memory_space<vmem>>, vector<256x784xbf16>
    %cst_38 = arith.constant dense<0.000000e+00> : vector<40x784xf32>
    %61 = tpu.matmul %59, %60, %cst_38 {dimension_numbers = #tpu.dot_dimension_numbers<[1], [0], [0], [1], [0, 0, 1, 1], [], []>} : vector<40x256xbf16>, vector<256x784xbf16>, vector<40x784xf32> -> vector<40x784xf32>
    %c0_39 = arith.constant 0 : index
    %c0_40 = arith.constant 0 : index
    %62 = vector.load %arg14[%c0_39, %c0_40] : memref<1x784xf32, #tpu.memory_space<vmem>>, vector<1x784xf32>
    %63 = vector.broadcast %62 : vector<1x784xf32> to vector<40x784xf32>
    %64 = arith.addf %61, %63 : vector<40x784xf32>
    %cst_41 = arith.constant 5.000000e-01 : f32
    %65 = vector.broadcast %cst_41 : f32 to vector<40x784xf32>
    %66 = arith.mulf %65, %64 : vector<40x784xf32>
    %67 = math.tanh %66 : vector<40x784xf32>
    %cst_42 = arith.constant 1.000000e+00 : f32
    %68 = vector.broadcast %cst_42 : f32 to vector<40x784xf32>
    %69 = arith.addf %67, %68 : vector<40x784xf32>
    %cst_43 = arith.constant 5.000000e-01 : f32
    %70 = vector.broadcast %cst_43 : f32 to vector<40x784xf32>
    %71 = arith.mulf %70, %69 : vector<40x784xf32>
    %c0_44 = arith.constant 0 : index
    %c0_45 = arith.constant 0 : index
    %72 = vector.load %arg16[%c0_44, %c0_45] : memref<40x784xf32, #tpu.memory_space<vmem>>, vector<40x784xf32>
    tpu.vector_store %arg16[%c0_44, %c0_45], %71 {strides = array<i32>} : memref<40x784xf32, #tpu.memory_space<vmem>>, vector<40x784xf32>,
    return
  }
}

</mosaic_0001>

<llo_original>
// kernel: tpu_custom_call.1
$region0: #{tpu_custom_call.1}
  #allocation0 [shape = 'u32[]', space=smem, size = 0x4, offset = 0x4, fixed_abs, tag = 'smem constant byte address 0x4 - core index']
  #allocation1 [shape = 'u32[144,128]{1,0:T(1,128)}', space=vmem, size = 0x12000, scoped, tag = 'internal scratch']
  %s0 = inlined_call_operand.vmem [shape: f32[2,784], index: 0, kind: input, shape index: {}]
  %s1 = inlined_call_operand.vmem [shape: f32[40,2], index: 1, kind: input, shape index: {}]
  %s2 = inlined_call_operand.vmem [shape: f32[40,2], index: 2, kind: input, shape index: {}]
  %s3 = inlined_call_operand.vmem [shape: bf16[784,256], index: 3, kind: input, shape index: {}]
  %s4 = inlined_call_operand.vmem [shape: f32[1,256], index: 4, kind: input, shape index: {}]
  %s5 = inlined_call_operand.vmem [shape: bf16[256,64], index: 5, kind: input, shape index: {}]
  %s6 = inlined_call_operand.vmem [shape: f32[1,64], index: 6, kind: input, shape index: {}]
  %s7 = inlined_call_operand.vmem [shape: bf16[64,4], index: 7, kind: input, shape index: {}]
  %s8 = inlined_call_operand.vmem [shape: f32[1,4], index: 8, kind: input, shape index: {}]
  %s9 = inlined_call_operand.vmem [shape: f32[2,64], index: 9, kind: input, shape index: {}]
  %s10 = inlined_call_operand.vmem [shape: f32[1,64], index: 10, kind: input, shape index: {}]
  %s11 = inlined_call_operand.vmem [shape: bf16[64,256], index: 11, kind: input, shape index: {}]
  %s12 = inlined_call_operand.vmem [shape: f32[1,256], index: 12, kind: input, shape index: {}]
  %s13 = inlined_call_operand.vmem [shape: bf16[256,784], index: 13, kind: input, shape index: {}]
  %s14 = inlined_call_operand.vmem [shape: f32[1,784], index: 14, kind: input, shape index: {}]
  %s15 = inlined_call_operand.hbm [shape: f32[2,4], index: 15, kind: output, shape index: {0}]
  %s16 = inlined_call_operand.hbm [shape: f32[40,784], index: 16, kind: output, shape index: {1}]
  %17 = xla_tuple %s15, %s16
  %s18 = sld [smem:[#allocation0]]
  $region78: #{tpu_custom_call.1} parent=0
    _
  %s20 = ssub.s32 1, %s18
  %s21 = scalar_select 0, %s20, %s18
  $region1: #{tpu_custom_call.1} parent=0
    #allocation2 [shape = 'u8[1024]{0}', space=vmem, size = 0x400, scoped, tag = 'output window, operand 0, single buffered']
    #allocation3 [shape = 's32[1]{0}', space=sflag, size = 0x4, scoped, tag = 'scoped memory for tpu_custom_call.1']
    #allocation4 [shape = 'u8[143360]{0}', space=vmem, size = 0x23000, scoped, tag = 'output window, operand 1, single buffered']
    #allocation5 [shape = 's32[1]{0}', space=sflag, size = 0x4, scoped, tag = 'scoped memory for tpu_custom_call.1']
    %22 = vsyncpa [#allocation3], 0
    %23 = vsyncpa [#allocation5], 0
    // Predicated region
    $region2: #{tpu_custom_call.1} parent=1 // pred_check
      _
    $region3: #{tpu_custom_call.1} parent=1 // pred_check_branch
      %25 = sbr.rel (0) target = $region5
    $region4: #{tpu_custom_call.1} parent=1 // pred_region
      _
    $region5: #{tpu_custom_call.1} parent=1 // pred_fallthru
      _
    // Predicated region
    $region6: #{tpu_custom_call.1} parent=1 // pred_check
      _
    $region7: #{tpu_custom_call.1} parent=1 // pred_check_branch
      %27 = sbr.rel (0) target = $region9
    $region8: #{tpu_custom_call.1} parent=1 // pred_region
      _
    $region9: #{tpu_custom_call.1} parent=1 // pred_fallthru
      _
    // Predicated region
    $region10: #{tpu_custom_call.1} parent=1 // pred_check
      _
    $region11: #{tpu_custom_call.1} parent=1 // pred_check_branch
      %29 = sbr.rel (0) target = $region13
    $region12: #{tpu_custom_call.1} parent=1 // pred_region
      _
    $region13: #{tpu_custom_call.1} parent=1 // pred_fallthru
      _
    // Predicated region
    $region14: #{tpu_custom_call.1} parent=1 // pred_check
      _
    $region15: #{tpu_custom_call.1} parent=1 // pred_check_branch
      %31 = sbr.rel (0) target = $region17
    $region16: #{tpu_custom_call.1} parent=1 // pred_region
      _
    $region17: #{tpu_custom_call.1} parent=1 // pred_fallthru
      _
    // Predicated region
    $region18: #{tpu_custom_call.1} parent=1 // pred_check
      _
    $region19: #{tpu_custom_call.1} parent=1 // pred_check_branch
      %33 = sbr.rel (0) target = $region21
    $region20: #{tpu_custom_call.1} parent=1 // pred_region
      _
    $region21: #{tpu_custom_call.1} parent=1 // pred_fallthru
      _
    // Predicated region
    $region22: #{tpu_custom_call.1} parent=1 // pred_check
      _
    $region23: #{tpu_custom_call.1} parent=1 // pred_check_branch
      %35 = sbr.rel (0) target = $region25
    $region24: #{tpu_custom_call.1} parent=1 // pred_region
      _
    $region25: #{tpu_custom_call.1} parent=1 // pred_fallthru
      _
    // Predicated region
    $region26: #{tpu_custom_call.1} parent=1 // pred_check
      _
    $region27: #{tpu_custom_call.1} parent=1 // pred_check_branch
      %37 = sbr.rel (0) target = $region29
    $region28: #{tpu_custom_call.1} parent=1 // pred_region
      _
    $region29: #{tpu_custom_call.1} parent=1 // pred_fallthru
      _
    // Predicated region
    $region30: #{tpu_custom_call.1} parent=1 // pred_check
      _
    $region31: #{tpu_custom_call.1} parent=1 // pred_check_branch
      %39 = sbr.rel (0) target = $region33
    $region32: #{tpu_custom_call.1} parent=1 // pred_region
      _
    $region33: #{tpu_custom_call.1} parent=1 // pred_fallthru
      _
    // Predicated region
    $region34: #{tpu_custom_call.1} parent=1 // pred_check
      _
    $region35: #{tpu_custom_call.1} parent=1 // pred_check_branch
      %41 = sbr.rel (0) target = $region37
    $region36: #{tpu_custom_call.1} parent=1 // pred_region
      _
    $region37: #{tpu_custom_call.1} parent=1 // pred_fallthru
      _
    // Predicated region
    $region38: #{tpu_custom_call.1} parent=1 // pred_check
      _
    $region39: #{tpu_custom_call.1} parent=1 // pred_check_branch
      %43 = sbr.rel (0) target = $region41
    $region40: #{tpu_custom_call.1} parent=1 // pred_region
      _
    $region41: #{tpu_custom_call.1} parent=1 // pred_fallthru
      _
    // Predicated region
    $region42: #{tpu_custom_call.1} parent=1 // pred_check
      _
    $region43: #{tpu_custom_call.1} parent=1 // pred_check_branch
      %45 = sbr.rel (0) target = $region45
    $region44: #{tpu_custom_call.1} parent=1 // pred_region
      _
    $region45: #{tpu_custom_call.1} parent=1 // pred_fallthru
      _
    // Predicated region
    $region46: #{tpu_custom_call.1} parent=1 // pred_check
      _
    $region47: #{tpu_custom_call.1} parent=1 // pred_check_branch
      %47 = sbr.rel (0) target = $region49
    $region48: #{tpu_custom_call.1} parent=1 // pred_region
      _
    $region49: #{tpu_custom_call.1} parent=1 // pred_fallthru
      _
    // Predicated region
    $region50: #{tpu_custom_call.1} parent=1 // pred_check
      _
    $region51: #{tpu_custom_call.1} parent=1 // pred_check_branch
      %49 = sbr.rel (0) target = $region53
    $region52: #{tpu_custom_call.1} parent=1 // pred_region
      _
    $region53: #{tpu_custom_call.1} parent=1 // pred_fallthru
      _
    // Predicated region
    $region54: #{tpu_custom_call.1} parent=1 // pred_check
      _
    $region55: #{tpu_custom_call.1} parent=1 // pred_check_branch
      %51 = sbr.rel (0) target = $region57
    $region56: #{tpu_custom_call.1} parent=1 // pred_region
      _
    $region57: #{tpu_custom_call.1} parent=1 // pred_fallthru
      _
    // Predicated region
    $region58: #{tpu_custom_call.1} parent=1 // pred_check
      _
    $region59: #{tpu_custom_call.1} parent=1 // pred_check_branch
      %53 = sbr.rel (0) target = $region61
    $region60: #{tpu_custom_call.1} parent=1 // pred_region
      _
    $region61: #{tpu_custom_call.1} parent=1 // pred_fallthru
      _
    %v55 = vld [vmem:[%s0] sm:$0xff]
    %v56 = vld [vmem:[%s0 + $0x8] sm:$0x3f]
    %v59 = vcombine.high %v55, %v55
    %v61 = vunpack.c.l.s4 1983009808
    %v62 = vunpack.c.0.s8 %v61
    %v63 = vlaneseq
    %v64 = vshrl.u32 %v63, 7
    %v65 = vsub.s32 %v62, %v64
    %v66 = vrot.slane %v55, %v65
    %v68 = vunpack.c.l.s4 1983009808
    %v69 = vunpack.c.0.s8 %v68
    %v70 = vlaneseq
    %v71 = vshrl.u32 %v70, 7
    %v72 = vsub.s32 %v69, %v71
    %v73 = vrot.slane %v59, %v72
    %v74 = vcombine.high %v66, %v66
    %v75 = vcombine.high %v73, %v73
    %v76 = vcombine.high %v56, %v56
    %v78 = vunpack.c.l.s4 1983009808
    %v79 = vunpack.c.0.s8 %v78
    %v80 = vlaneseq
    %v81 = vshrl.u32 %v80, 7
    %v82 = vsub.s32 %v79, %v81
    %v83 = vrot.slane %v56, %v82
    %v85 = vunpack.c.l.s4 1983009808
    %v86 = vunpack.c.0.s8 %v85
    %v87 = vlaneseq
    %v88 = vshrl.u32 %v87, 7
    %v89 = vsub.s32 %v86, %v88
    %v90 = vrot.slane %v76, %v89
    %v91 = vcombine.high %v83, %v83
    %v99 = vpack.c.bf16 %v66, %v66
    %v100 = vpack.c.bf16 %v74, %v74
    %v101 = vpack.c.bf16 %v73, %v73
    %v102 = vpack.c.bf16 %v75, %v75
    %v103 = vpack.c.bf16 %v83, %v83
    %v104 = vpack.c.bf16 %v91, %v91
    %v105 = vpack.c.bf16 %v90, %v90
    %v106 = vld [vmem:[%s3] sm:$0xff]
    %v107 = vld [vmem:[%s3 + $0x8] sm:$0xff]
    %v108 = vld [vmem:[%s3 + $0x10] sm:$0xff]
    %v109 = vld [vmem:[%s3 + $0x18] sm:$0xff]
    %v110 = vld [vmem:[%s3 + $0x20] sm:$0xff]
    %v111 = vld [vmem:[%s3 + $0x28] sm:$0xff]
    %v112 = vld [vmem:[%s3 + $0x30] sm:$0xff]
    %v113 = vld [vmem:[%s3 + $0x38] sm:$0xff]
    %v114 = vld [vmem:[%s3 + $0x40] sm:$0xff]
    %v115 = vld [vmem:[%s3 + $0x48] sm:$0xff]
    %v116 = vld [vmem:[%s3 + $0x50] sm:$0xff]
    %v117 = vld [vmem:[%s3 + $0x58] sm:$0xff]
    %v118 = vld [vmem:[%s3 + $0x60] sm:$0xff]
    %v119 = vld [vmem:[%s3 + $0x68] sm:$0xff]
    %v120 = vld [vmem:[%s3 + $0x70] sm:$0xff]
    %v121 = vld [vmem:[%s3 + $0x78] sm:$0xff]
    %v122 = vld [vmem:[%s3 + $0x80] sm:$0xff]
    %v123 = vld [vmem:[%s3 + $0x88] sm:$0xff]
    %v124 = vld [vmem:[%s3 + $0x90] sm:$0xff]
    %v125 = vld [vmem:[%s3 + $0x98] sm:$0xff]
    %v126 = vld [vmem:[%s3 + $0xa0] sm:$0xff]
    %v127 = vld [vmem:[%s3 + $0xa8] sm:$0xff]
    %v128 = vld [vmem:[%s3 + $0xb0] sm:$0xff]
    %v129 = vld [vmem:[%s3 + $0xb8] sm:$0xff]
    %v130 = vld [vmem:[%s3 + $0xc0] sm:$0xff]
    %v131 = vld [vmem:[%s3 + $0xc8] sm:$0xff]
    %v132 = vld [vmem:[%s3 + $0xd0] sm:$0xff]
    %v133 = vld [vmem:[%s3 + $0xd8] sm:$0xff]
    %v134 = vld [vmem:[%s3 + $0xe0] sm:$0xff]
    %v135 = vld [vmem:[%s3 + $0xe8] sm:$0xff]
    %v136 = vld [vmem:[%s3 + $0xf0] sm:$0xff]
    %v137 = vld [vmem:[%s3 + $0xf8] sm:$0xff]
    %v138 = vld [vmem:[%s3 + $0x100] sm:$0xff]
    %v139 = vld [vmem:[%s3 + $0x108] sm:$0xff]
    %v140 = vld [vmem:[%s3 + $0x110] sm:$0xff]
    %v141 = vld [vmem:[%s3 + $0x118] sm:$0xff]
    %v142 = vld [vmem:[%s3 + $0x120] sm:$0xff]
    %v143 = vld [vmem:[%s3 + $0x128] sm:$0xff]
    %v144 = vld [vmem:[%s3 + $0x130] sm:$0xff]
    %v145 = vld [vmem:[%s3 + $0x138] sm:$0xff]
    %v146 = vld [vmem:[%s3 + $0x140] sm:$0xff]
    %v147 = vld [vmem:[%s3 + $0x148] sm:$0xff]
    %v148 = vld [vmem:[%s3 + $0x150] sm:$0xff]
    %v149 = vld [vmem:[%s3 + $0x158] sm:$0xff]
    %v150 = vld [vmem:[%s3 + $0x160] sm:$0xff]
    %v151 = vld [vmem:[%s3 + $0x168] sm:$0xff]
    %v152 = vld [vmem:[%s3 + $0x170] sm:$0xff]
    %v153 = vld [vmem:[%s3 + $0x178] sm:$0xff]
    %v154 = vld [vmem:[%s3 + $0x180] sm:$0xff]
    %v155 = vld [vmem:[%s3 + $0x188] sm:$0xff]
    %v156 = vld [vmem:[%s3 + $0x190] sm:$0xff]
    %v157 = vld [vmem:[%s3 + $0x198] sm:$0xff]
    %v158 = vld [vmem:[%s3 + $0x1a0] sm:$0xff]
    %v159 = vld [vmem:[%s3 + $0x1a8] sm:$0xff]
    %v160 = vld [vmem:[%s3 + $0x1b0] sm:$0xff]
    %v161 = vld [vmem:[%s3 + $0x1b8] sm:$0xff]
    %v162 = vld [vmem:[%s3 + $0x1c0] sm:$0xff]
    %v163 = vld [vmem:[%s3 + $0x1c8] sm:$0xff]
    %v164 = vld [vmem:[%s3 + $0x1d0] sm:$0xff]
    %v165 = vld [vmem:[%s3 + $0x1d8] sm:$0xff]
    %v166 = vld [vmem:[%s3 + $0x1e0] sm:$0xff]
    %v167 = vld [vmem:[%s3 + $0x1e8] sm:$0xff]
    %v168 = vld [vmem:[%s3 + $0x1f0] sm:$0xff]
    %v169 = vld [vmem:[%s3 + $0x1f8] sm:$0xff]
    %v170 = vld [vmem:[%s3 + $0x200] sm:$0xff]
    %v171 = vld [vmem:[%s3 + $0x208] sm:$0xff]
    %v172 = vld [vmem:[%s3 + $0x210] sm:$0xff]
    %v173 = vld [vmem:[%s3 + $0x218] sm:$0xff]
    %v174 = vld [vmem:[%s3 + $0x220] sm:$0xff]
    %v175 = vld [vmem:[%s3 + $0x228] sm:$0xff]
    %v176 = vld [vmem:[%s3 + $0x230] sm:$0xff]
    %v177 = vld [vmem:[%s3 + $0x238] sm:$0xff]
    %v178 = vld [vmem:[%s3 + $0x240] sm:$0xff]
    %v179 = vld [vmem:[%s3 + $0x248] sm:$0xff]
    %v180 = vld [vmem:[%s3 + $0x250] sm:$0xff]
    %v181 = vld [vmem:[%s3 + $0x258] sm:$0xff]
    %v182 = vld [vmem:[%s3 + $0x260] sm:$0xff]
    %v183 = vld [vmem:[%s3 + $0x268] sm:$0xff]
    %v184 = vld [vmem:[%s3 + $0x270] sm:$0xff]
    %v185 = vld [vmem:[%s3 + $0x278] sm:$0xff]
    %v186 = vld [vmem:[%s3 + $0x280] sm:$0xff]
    %v187 = vld [vmem:[%s3 + $0x288] sm:$0xff]
    %v188 = vld [vmem:[%s3 + $0x290] sm:$0xff]
    %v189 = vld [vmem:[%s3 + $0x298] sm:$0xff]
    %v190 = vld [vmem:[%s3 + $0x2a0] sm:$0xff]
    %v191 = vld [vmem:[%s3 + $0x2a8] sm:$0xff]
    %v192 = vld [vmem:[%s3 + $0x2b0] sm:$0xff]
    %v193 = vld [vmem:[%s3 + $0x2b8] sm:$0xff]
    %v194 = vld [vmem:[%s3 + $0x2c0] sm:$0xff]
    %v195 = vld [vmem:[%s3 + $0x2c8] sm:$0xff]
    %v196 = vld [vmem:[%s3 + $0x2d0] sm:$0xff]
    %v197 = vld [vmem:[%s3 + $0x2d8] sm:$0xff]
    %v198 = vld [vmem:[%s3 + $0x2e0] sm:$0xff]
    %v199 = vld [vmem:[%s3 + $0x2e8] sm:$0xff]
    %v200 = vld [vmem:[%s3 + $0x2f0] sm:$0xff]
    %v201 = vld [vmem:[%s3 + $0x2f8] sm:$0xff]
    %v202 = vld [vmem:[%s3 + $0x300] sm:$0xff]
    %v203 = vld [vmem:[%s3 + $0x308] sm:$0xff]
    %v204 = vld [vmem:[%s4] sm:$0x3]
    %v206 = vlaneseq
    %v207 = vshrl.u32 %v206, 7
    %v208 = vsub.s32 0, %v207
    %v209 = vrot.slane %v204, %v208
    %v210 = vlaneseq
    %v211 = vshrl.u32 %v210, 7
    %v212 = vsub.s32 1, %v211
    %v213 = vrot.slane %v204, %v212
    %v314 = vunpack.c.l.b16 %v106
    %v315 = vunpack.c.h.b16 %v106
    %v316 = vunpack.c.l.b16 %v107
    %v317 = vunpack.c.h.b16 %v107
    %v318 = vunpack.c.l.b16 %v108
    %v319 = vunpack.c.h.b16 %v108
    %v320 = vunpack.c.l.b16 %v109
    %v321 = vunpack.c.h.b16 %v109
    %v322 = vunpack.c.l.b16 %v110
    %v323 = vunpack.c.h.b16 %v110
    %v324 = vunpack.c.l.b16 %v111
    %v325 = vunpack.c.h.b16 %v111
    %v326 = vunpack.c.l.b16 %v112
    %v327 = vunpack.c.h.b16 %v112
    %v328 = vunpack.c.l.b16 %v113
    %v329 = vunpack.c.h.b16 %v113
    %v330 = vunpack.c.l.b16 %v114
    %v331 = vunpack.c.h.b16 %v114
    %v332 = vunpack.c.l.b16 %v115
    %v333 = vunpack.c.h.b16 %v115
    %v334 = vunpack.c.l.b16 %v116
    %v335 = vunpack.c.h.b16 %v116
    %v336 = vunpack.c.l.b16 %v117
    %v337 = vunpack.c.h.b16 %v117
    %v338 = vunpack.c.l.b16 %v118
    %v339 = vunpack.c.h.b16 %v118
    %v340 = vunpack.c.l.b16 %v119
    %v341 = vunpack.c.h.b16 %v119
    %v342 = vunpack.c.l.b16 %v120
    %v343 = vunpack.c.h.b16 %v120
    %v344 = vunpack.c.l.b16 %v121
    %v345 = vunpack.c.h.b16 %v121
    %v346 = vunpack.c.l.b16 %v122
    %v347 = vunpack.c.h.b16 %v122
    %v348 = vunpack.c.l.b16 %v123
    %v349 = vunpack.c.h.b16 %v123
    %v350 = vunpack.c.l.b16 %v124
    %v351 = vunpack.c.h.b16 %v124
    %v352 = vunpack.c.l.b16 %v125
    %v353 = vunpack.c.h.b16 %v125
    %v354 = vunpack.c.l.b16 %v126
    %v355 = vunpack.c.h.b16 %v126
    %v356 = vunpack.c.l.b16 %v127
    %v357 = vunpack.c.h.b16 %v127
    %v358 = vunpack.c.l.b16 %v128
    %v359 = vunpack.c.h.b16 %v128
    %v360 = vunpack.c.l.b16 %v129
    %v361 = vunpack.c.h.b16 %v129
    %v362 = vunpack.c.l.b16 %v130
    %v363 = vunpack.c.h.b16 %v130
    %v364 = vunpack.c.l.b16 %v131
    %v365 = vunpack.c.h.b16 %v131
    %v366 = vunpack.c.l.b16 %v132
    %v367 = vunpack.c.h.b16 %v132
    %v368 = vunpack.c.l.b16 %v133
    %v369 = vunpack.c.h.b16 %v133
    %v370 = vunpack.c.l.b16 %v134
    %v371 = vunpack.c.h.b16 %v134
    %v372 = vunpack.c.l.b16 %v135
    %v373 = vunpack.c.h.b16 %v135
    %v374 = vunpack.c.l.b16 %v136
    %v375 = vunpack.c.h.b16 %v136
    %v376 = vunpack.c.l.b16 %v137
    %v377 = vunpack.c.h.b16 %v137
    %v378 = vunpack.c.l.b16 %v138
    %v379 = vunpack.c.h.b16 %v138
    %v380 = vunpack.c.l.b16 %v139
    %v381 = vunpack.c.h.b16 %v139
    %v382 = vunpack.c.l.b16 %v140
    %v383 = vunpack.c.h.b16 %v140
    %v384 = vunpack.c.l.b16 %v141
    %v385 = vunpack.c.h.b16 %v141
    %v386 = vunpack.c.l.b16 %v142
    %v387 = vunpack.c.h.b16 %v142
    %v388 = vunpack.c.l.b16 %v143
    %v389 = vunpack.c.h.b16 %v143
    %v390 = vunpack.c.l.b16 %v144
    %v391 = vunpack.c.h.b16 %v144
    %v392 = vunpack.c.l.b16 %v145
    %v393 = vunpack.c.h.b16 %v145
    %v394 = vunpack.c.l.b16 %v146
    %v395 = vunpack.c.h.b16 %v146
    %v396 = vunpack.c.l.b16 %v147
    %v397 = vunpack.c.h.b16 %v147
    %v398 = vunpack.c.l.b16 %v148
    %v399 = vunpack.c.h.b16 %v148
    %v400 = vunpack.c.l.b16 %v149
    %v401 = vunpack.c.h.b16 %v149
    %v402 = vunpack.c.l.b16 %v150
    %v403 = vunpack.c.h.b16 %v150
    %v404 = vunpack.c.l.b16 %v151
    %v405 = vunpack.c.h.b16 %v151
    %v406 = vunpack.c.l.b16 %v152
    %v407 = vunpack.c.h.b16 %v152
    %v408 = vunpack.c.l.b16 %v153
    %v409 = vunpack.c.h.b16 %v153
    %v410 = vunpack.c.l.b16 %v154
    %v411 = vunpack.c.h.b16 %v154
    %v412 = vunpack.c.l.b16 %v155
    %v413 = vunpack.c.h.b16 %v155
    %v414 = vunpack.c.l.b16 %v156
    %v415 = vunpack.c.h.b16 %v156
    %v416 = vunpack.c.l.b16 %v157
    %v417 = vunpack.c.h.b16 %v157
    %v418 = vunpack.c.l.b16 %v158
    %v419 = vunpack.c.h.b16 %v158
    %v420 = vunpack.c.l.b16 %v159
    %v421 = vunpack.c.h.b16 %v159
    %v422 = vunpack.c.l.b16 %v160
    %v423 = vunpack.c.h.b16 %v160
    %v424 = vunpack.c.l.b16 %v161
    %v425 = vunpack.c.h.b16 %v161
    %v426 = vunpack.c.l.b16 %v162
    %v427 = vunpack.c.h.b16 %v162
    %v428 = vunpack.c.l.b16 %v163
    %v429 = vunpack.c.h.b16 %v163
    %v430 = vunpack.c.l.b16 %v164
    %v431 = vunpack.c.h.b16 %v164
    %v432 = vunpack.c.l.b16 %v165
    %v433 = vunpack.c.h.b16 %v165
    %v434 = vunpack.c.l.b16 %v166
    %v435 = vunpack.c.h.b16 %v166
    %v436 = vunpack.c.l.b16 %v167
    %v437 = vunpack.c.h.b16 %v167
    %v438 = vunpack.c.l.b16 %v168
    %v439 = vunpack.c.h.b16 %v168
    %v440 = vunpack.c.l.b16 %v169
    %v441 = vunpack.c.h.b16 %v169
    %v442 = vunpack.c.l.b16 %v170
    %v443 = vunpack.c.h.b16 %v170
    %v444 = vunpack.c.l.b16 %v171
    %v445 = vunpack.c.h.b16 %v171
    %v446 = vunpack.c.l.b16 %v172
    %v447 = vunpack.c.h.b16 %v172
    %v448 = vunpack.c.l.b16 %v173
    %v449 = vunpack.c.h.b16 %v173
    %v450 = vunpack.c.l.b16 %v174
    %v451 = vunpack.c.h.b16 %v174
    %v452 = vunpack.c.l.b16 %v175
    %v453 = vunpack.c.h.b16 %v175
    %v454 = vunpack.c.l.b16 %v176
    %v455 = vunpack.c.h.b16 %v176
    %v456 = vunpack.c.l.b16 %v177
    %v457 = vunpack.c.h.b16 %v177
    %v458 = vunpack.c.l.b16 %v178
    %v459 = vunpack.c.h.b16 %v178
    %v460 = vunpack.c.l.b16 %v179
    %v461 = vunpack.c.h.b16 %v179
    %v462 = vunpack.c.l.b16 %v180
    %v463 = vunpack.c.h.b16 %v180
    %v464 = vunpack.c.l.b16 %v181
    %v465 = vunpack.c.h.b16 %v181
    %v466 = vunpack.c.l.b16 %v182
    %v467 = vunpack.c.h.b16 %v182
    %v468 = vunpack.c.l.b16 %v183
    %v469 = vunpack.c.h.b16 %v183
    %v470 = vunpack.c.l.b16 %v184
    %v471 = vunpack.c.h.b16 %v184
    %v472 = vunpack.c.l.b16 %v185
    %v473 = vunpack.c.h.b16 %v185
    %v474 = vunpack.c.l.b16 %v186
    %v475 = vunpack.c.h.b16 %v186
    %v476 = vunpack.c.l.b16 %v187
    %v477 = vunpack.c.h.b16 %v187
    %v478 = vunpack.c.l.b16 %v188
    %v479 = vunpack.c.h.b16 %v188
    %v480 = vunpack.c.l.b16 %v189
    %v481 = vunpack.c.h.b16 %v189
    %v482 = vunpack.c.l.b16 %v190
    %v483 = vunpack.c.h.b16 %v190
    %v484 = vunpack.c.l.b16 %v191
    %v485 = vunpack.c.h.b16 %v191
    %v486 = vunpack.c.l.b16 %v192
    %v487 = vunpack.c.h.b16 %v192
    %v488 = vunpack.c.l.b16 %v193
    %v489 = vunpack.c.h.b16 %v193
    %v490 = vunpack.c.l.b16 %v194
    %v491 = vunpack.c.h.b16 %v194
    %v492 = vunpack.c.l.b16 %v195
    %v493 = vunpack.c.h.b16 %v195
    %v494 = vunpack.c.l.b16 %v196
    %v495 = vunpack.c.h.b16 %v196
    %v496 = vunpack.c.l.b16 %v197
    %v497 = vunpack.c.h.b16 %v197
    %v498 = vunpack.c.l.b16 %v198
    %v499 = vunpack.c.h.b16 %v198
    %v500 = vunpack.c.l.b16 %v199
    %v501 = vunpack.c.h.b16 %v199
    %v502 = vunpack.c.l.b16 %v200
    %v503 = vunpack.c.h.b16 %v200
    %v504 = vunpack.c.l.b16 %v201
    %v505 = vunpack.c.h.b16 %v201
    %v506 = vunpack.c.l.b16 %v202
    %v507 = vunpack.c.h.b16 %v202
    %v508 = vunpack.c.l.b16 %v203
    %v509 = vunpack.c.h.b16 %v203
    %v510 = vpack.c.b16 %v316, %v314
    %v511 = vpack.c.b16 %v317, %v315
    %v512 = vpack.c.b16 %v320, %v318
    %v513 = vpack.c.b16 %v321, %v319
    %v514 = vpack.c.b16 %v324, %v322
    %v515 = vpack.c.b16 %v325, %v323
    %v516 = vpack.c.b16 %v328, %v326
    %v517 = vpack.c.b16 %v329, %v327
    %v518 = vpack.c.b16 %v332, %v330
    %v519 = vpack.c.b16 %v333, %v331
    %v520 = vpack.c.b16 %v336, %v334
    %v521 = vpack.c.b16 %v337, %v335
    %v522 = vpack.c.b16 %v340, %v338
    %v523 = vpack.c.b16 %v341, %v339
    %v524 = vpack.c.b16 %v344, %v342
    %v525 = vpack.c.b16 %v345, %v343
    %v526 = vpack.c.b16 %v348, %v346
    %v527 = vpack.c.b16 %v349, %v347
    %v528 = vpack.c.b16 %v352, %v350
    %v529 = vpack.c.b16 %v353, %v351
    %v530 = vpack.c.b16 %v356, %v354
    %v531 = vpack.c.b16 %v357, %v355
    %v532 = vpack.c.b16 %v360, %v358
    %v533 = vpack.c.b16 %v361, %v359
    %v534 = vpack.c.b16 %v364, %v362
    %v535 = vpack.c.b16 %v365, %v363
    %v536 = vpack.c.b16 %v368, %v366
    %v537 = vpack.c.b16 %v369, %v367
    %v538 = vpack.c.b16 %v372, %v370
    %v539 = vpack.c.b16 %v373, %v371
    %v540 = vpack.c.b16 %v376, %v374
    %v541 = vpack.c.b16 %v377, %v375
    %v542 = vpack.c.b16 %v380, %v378
    %v543 = vpack.c.b16 %v381, %v379
    %v544 = vpack.c.b16 %v384, %v382
    %v545 = vpack.c.b16 %v385, %v383
    %v546 = vpack.c.b16 %v388, %v386
    %v547 = vpack.c.b16 %v389, %v387
    %v548 = vpack.c.b16 %v392, %v390
    %v549 = vpack.c.b16 %v393, %v391
    %v550 = vpack.c.b16 %v396, %v394
    %v551 = vpack.c.b16 %v397, %v395
    %v552 = vpack.c.b16 %v400, %v398
    %v553 = vpack.c.b16 %v401, %v399
    %v554 = vpack.c.b16 %v404, %v402
    %v555 = vpack.c.b16 %v405, %v403
    %v556 = vpack.c.b16 %v408, %v406
    %v557 = vpack.c.b16 %v409, %v407
    %v558 = vpack.c.b16 %v412, %v410
    %v559 = vpack.c.b16 %v413, %v411
    %v560 = vpack.c.b16 %v416, %v414
    %v561 = vpack.c.b16 %v417, %v415
    %v562 = vpack.c.b16 %v420, %v418
    %v563 = vpack.c.b16 %v421, %v419
    %v564 = vpack.c.b16 %v424, %v422
    %v565 = vpack.c.b16 %v425, %v423
    %v566 = vpack.c.b16 %v428, %v426
    %v567 = vpack.c.b16 %v429, %v427
    %v568 = vpack.c.b16 %v432, %v430
    %v569 = vpack.c.b16 %v433, %v431
    %v570 = vpack.c.b16 %v436, %v434
    %v571 = vpack.c.b16 %v437, %v435
    %v572 = vpack.c.b16 %v440, %v438
    %v573 = vpack.c.b16 %v441, %v439
    %v574 = vpack.c.b16 %v444, %v442
    %v575 = vpack.c.b16 %v445, %v443
    %v576 = vpack.c.b16 %v448, %v446
    %v577 = vpack.c.b16 %v449, %v447
    %v578 = vpack.c.b16 %v452, %v450
    %v579 = vpack.c.b16 %v453, %v451
    %v580 = vpack.c.b16 %v456, %v454
    %v581 = vpack.c.b16 %v457, %v455
    %v582 = vpack.c.b16 %v460, %v458
    %v583 = vpack.c.b16 %v461, %v459
    %v584 = vpack.c.b16 %v464, %v462
    %v585 = vpack.c.b16 %v465, %v463
    %v586 = vpack.c.b16 %v468, %v466
    %v587 = vpack.c.b16 %v469, %v467
    %v588 = vpack.c.b16 %v472, %v470
    %v589 = vpack.c.b16 %v473, %v471
    %v590 = vpack.c.b16 %v476, %v474
    %v591 = vpack.c.b16 %v477, %v475
    %v592 = vpack.c.b16 %v480, %v478
    %v593 = vpack.c.b16 %v481, %v479
    %v594 = vpack.c.b16 %v484, %v482
    %v595 = vpack.c.b16 %v485, %v483
    %v596 = vpack.c.b16 %v488, %v486
    %v597 = vpack.c.b16 %v489, %v487
    %v598 = vpack.c.b16 %v492, %v490
    %v599 = vpack.c.b16 %v493, %v491
    %v600 = vpack.c.b16 %v496, %v494
    %v601 = vpack.c.b16 %v497, %v495
    %v602 = vpack.c.b16 %v500, %v498
    %v603 = vpack.c.b16 %v501, %v499
    %v604 = vpack.c.b16 %v504, %v502
    %v605 = vpack.c.b16 %v505, %v503
    %v606 = vpack.c.b16 %v508, %v506
    %v607 = vpack.c.b16 %v509, %v507
    %vm706 = vcmask 130048
    %v708 = vsel %vm706, %v105, 0
    %710 = vmatprep.subr.bf16.mxu0 %v511
    %711 = vmatpush1.bf16.msra.mxu0 %v510
    %712 = vmatprep.subr.bf16.mxu0 %v513
    %713 = vmatpush1.bf16.msra.mxu0 %v512
    %714 = vmatprep.subr.bf16.mxu0 %v515
    %715 = vmatpush1.bf16.msra.mxu0 %v514
    %716 = vmatprep.subr.bf16.mxu0 %v517
    %717 = vmatpush1.bf16.msra.mxu0 %v516
    %718 = vmatprep.subr.bf16.mxu0 %v519
    %719 = vmatpush1.bf16.msra.mxu0 %v518
    %720 = vmatprep.subr.bf16.mxu0 %v521
    %721 = vmatpush1.bf16.msra.mxu0 %v520
    %722 = vmatprep.subr.bf16.mxu0 %v523
    %723 = vmatpush1.bf16.msra.mxu0 %v522
    %724 = vmatprep.subr.bf16.mxu0 %v525
    %725 = vmatpush1.bf16.msra.mxu0 %v524
    %726 = vmatprep.subr.bf16.mxu0 %v527
    %727 = vmatpush1.bf16.msra.mxu0 %v526
    %728 = vmatprep.subr.bf16.mxu0 %v529
    %729 = vmatpush1.bf16.msra.mxu0 %v528
    %730 = vmatprep.subr.bf16.mxu0 %v531
    %731 = vmatpush1.bf16.msra.mxu0 %v530
    %732 = vmatprep.subr.bf16.mxu0 %v533
    %733 = vmatpush1.bf16.msra.mxu0 %v532
    %734 = vmatprep.subr.bf16.mxu0 %v535
    %735 = vmatpush1.bf16.msra.mxu0 %v534
    %736 = vmatprep.subr.bf16.mxu0 %v537
    %737 = vmatpush1.bf16.msra.mxu0 %v536
    %738 = vmatprep.subr.bf16.mxu0 %v539
    %739 = vmatpush1.bf16.msra.mxu0 %v538
    %740 = vmatprep.subr.bf16.mxu0 %v541
    %741 = vmatpush1.bf16.msra.mxu0 %v540
    %742 = vmatprep.mubr.bf16.mxu0 %v100
    %743 = vmatmul.mubr.bf16.gmra.mrb[0].mxu0 %v99
    %v744 = vpop.f32.mrb[0].mxu0
    %v745 = vadd.f32 %v209, %v744
    %v746 = vpop.f32.mrb[0].mxu0
    %v747 = vadd.f32 %v213, %v746
    %v748 = vpop.f32.mrb[0].mxu0
    %v749 = vpop.f32.mrb[0].mxu0
    %750 = vdwg.mxu0
    %751 = vmatprep.subr.bf16.mxu0 %v543
    %752 = vmatpush1.bf16.msra.mxu0 %v542
    %753 = vmatprep.subr.bf16.mxu0 %v545
    %754 = vmatpush1.bf16.msra.mxu0 %v544
    %755 = vmatprep.subr.bf16.mxu0 %v547
    %756 = vmatpush1.bf16.msra.mxu0 %v546
    %757 = vmatprep.subr.bf16.mxu0 %v549
    %758 = vmatpush1.bf16.msra.mxu0 %v548
    %759 = vmatprep.subr.bf16.mxu0 %v551
    %760 = vmatpush1.bf16.msra.mxu0 %v550
    %761 = vmatprep.subr.bf16.mxu0 %v553
    %762 = vmatpush1.bf16.msra.mxu0 %v552
    %763 = vmatprep.subr.bf16.mxu0 %v555
    %764 = vmatpush1.bf16.msra.mxu0 %v554
    %765 = vmatprep.subr.bf16.mxu0 %v557
    %766 = vmatpush1.bf16.msra.mxu0 %v556
    %767 = vmatprep.subr.bf16.mxu0 %v559
    %768 = vmatpush1.bf16.msra.mxu0 %v558
    %769 = vmatprep.subr.bf16.mxu0 %v561
    %770 = vmatpush1.bf16.msra.mxu0 %v560
    %771 = vmatprep.subr.bf16.mxu0 %v563
    %772 = vmatpush1.bf16.msra.mxu0 %v562
    %773 = vmatprep.subr.bf16.mxu0 %v565
    %774 = vmatpush1.bf16.msra.mxu0 %v564
    %775 = vmatprep.subr.bf16.mxu0 %v567
    %776 = vmatpush1.bf16.msra.mxu0 %v566
    %777 = vmatprep.subr.bf16.mxu0 %v569
    %778 = vmatpush1.bf16.msra.mxu0 %v568
    %779 = vmatprep.subr.bf16.mxu0 %v571
    %780 = vmatpush1.bf16.msra.mxu0 %v570
    %781 = vmatprep.subr.bf16.mxu0 %v573
    %782 = vmatpush1.bf16.msra.mxu0 %v572
    %783 = vmatprep.mubr.bf16.mxu0 %v102
    %784 = vmatmul.mubr.bf16.gmra.mrb[0].mxu0 %v101
    %v785 = vpop.f32.mrb[0].mxu0
    %v786 = vadd.f32 %v745, %v785
    %v787 = vpop.f32.mrb[0].mxu0
    %v788 = vadd.f32 %v747, %v787
    %v789 = vpop.f32.mrb[0].mxu0
    %v790 = vpop.f32.mrb[0].mxu0
    %791 = vdwg.mxu0
    %792 = vmatprep.subr.bf16.mxu0 %v575
    %793 = vmatpush1.bf16.msra.mxu0 %v574
    %794 = vmatprep.subr.bf16.mxu0 %v577
    %795 = vmatpush1.bf16.msra.mxu0 %v576
    %796 = vmatprep.subr.bf16.mxu0 %v579
    %797 = vmatpush1.bf16.msra.mxu0 %v578
    %798 = vmatprep.subr.bf16.mxu0 %v581
    %799 = vmatpush1.bf16.msra.mxu0 %v580
    %800 = vmatprep.subr.bf16.mxu0 %v583
    %801 = vmatpush1.bf16.msra.mxu0 %v582
    %802 = vmatprep.subr.bf16.mxu0 %v585
    %803 = vmatpush1.bf16.msra.mxu0 %v584
    %804 = vmatprep.subr.bf16.mxu0 %v587
    %805 = vmatpush1.bf16.msra.mxu0 %v586
    %806 = vmatprep.subr.bf16.mxu0 %v589
    %807 = vmatpush1.bf16.msra.mxu0 %v588
    %808 = vmatprep.subr.bf16.mxu0 %v591
    %809 = vmatpush1.bf16.msra.mxu0 %v590
    %810 = vmatprep.subr.bf16.mxu0 %v593
    %811 = vmatpush1.bf16.msra.mxu0 %v592
    %812 = vmatprep.subr.bf16.mxu0 %v595
    %813 = vmatpush1.bf16.msra.mxu0 %v594
    %814 = vmatprep.subr.bf16.mxu0 %v597
    %815 = vmatpush1.bf16.msra.mxu0 %v596
    %816 = vmatprep.subr.bf16.mxu0 %v599
    %817 = vmatpush1.bf16.msra.mxu0 %v598
    %818 = vmatprep.subr.bf16.mxu0 %v601
    %819 = vmatpush1.bf16.msra.mxu0 %v600
    %820 = vmatprep.subr.bf16.mxu0 %v603
    %821 = vmatpush1.bf16.msra.mxu0 %v602
    %822 = vmatprep.subr.bf16.mxu0 %v605
    %823 = vmatpush1.bf16.msra.mxu0 %v604
    %824 = vmatprep.mubr.bf16.mxu0 %v104
    %825 = vmatmul.mubr.bf16.gmra.mrb[0].mxu0 %v103
    %v826 = vpop.f32.mrb[0].mxu0
    %v827 = vadd.f32 %v786, %v826
    %v828 = vpop.f32.mrb[0].mxu0
    %v829 = vadd.f32 %v788, %v828
    %v830 = vpop.f32.mrb[0].mxu0
    %v831 = vpop.f32.mrb[0].mxu0
    %832 = vdwg.mxu0
    %833 = vmatprep.subr.bf16.mxu0 %v607
    %834 = vmatpush1.bf16.msra.mxu0 %v606
    %835 = vmatprep.subr.bf16.mxu0 0
    %836 = vmatpush1.bf16.msra.mxu0 0
    %837 = vmatprep.subr.bf16.mxu0 0
    %838 = vmatpush1.bf16.msra.mxu0 0
    %839 = vmatprep.subr.bf16.mxu0 0
    %840 = vmatpush1.bf16.msra.mxu0 0
    %841 = vmatprep.subr.bf16.mxu0 0
    %842 = vmatpush1.bf16.msra.mxu0 0
    %843 = vmatprep.subr.bf16.mxu0 0
    %844 = vmatpush1.bf16.msra.mxu0 0
    %845 = vmatprep.subr.bf16.mxu0 0
    %846 = vmatpush1.bf16.msra.mxu0 0
    %847 = vmatprep.subr.bf16.mxu0 0
    %848 = vmatpush1.bf16.msra.mxu0 0
    %849 = vmatprep.subr.bf16.mxu0 0
    %850 = vmatpush1.bf16.msra.mxu0 0
    %851 = vmatprep.subr.bf16.mxu0 0
    %852 = vmatpush1.bf16.msra.mxu0 0
    %853 = vmatprep.subr.bf16.mxu0 0
    %854 = vmatpush1.bf16.msra.mxu0 0
    %855 = vmatprep.subr.bf16.mxu0 0
    %856 = vmatpush1.bf16.msra.mxu0 0
    %857 = vmatprep.subr.bf16.mxu0 0
    %858 = vmatpush1.bf16.msra.mxu0 0
    %859 = vmatprep.subr.bf16.mxu0 0
    %860 = vmatpush1.bf16.msra.mxu0 0
    %861 = vmatprep.subr.bf16.mxu0 0
    %862 = vmatpush1.bf16.msra.mxu0 0
    %863 = vmatprep.subr.bf16.mxu0 0
    %864 = vmatpush1.bf16.msra.mxu0 0
    %865 = vmatprep.mubr.bf16.mxu0 0
    %866 = vmatmul.mubr.bf16.gmra.mrb[0].mxu0 %v708
    %v867 = vpop.f32.mrb[0].mxu0
    %v868 = vadd.f32 %v827, %v867
    %v869 = vpop.f32.mrb[0].mxu0
    %v870 = vadd.f32 %v829, %v869
    %v871 = vpop.f32.mrb[0].mxu0
    %v872 = vpop.f32.mrb[0].mxu0
    %873 = vdwg.mxu0
    %v874 = vmax.f32 %v868, 0.0
    %v875 = vmax.f32 %v870, 0.0
    %v876 = vpack.c.bf16 %v874, %v874
    %v877 = vpack.c.bf16 %v875, %v875
    %v878 = vld [vmem:[%s5] sm:$0xf]
    %v879 = vld [vmem:[%s5 + $0x4] sm:$0xf]
    %v880 = vld [vmem:[%s5 + $0x8] sm:$0xf]
    %v881 = vld [vmem:[%s5 + $0xc] sm:$0xf]
    %v882 = vld [vmem:[%s5 + $0x10] sm:$0xf]
    %v883 = vld [vmem:[%s5 + $0x14] sm:$0xf]
    %v884 = vld [vmem:[%s5 + $0x18] sm:$0xf]
    %v885 = vld [vmem:[%s5 + $0x1c] sm:$0xf]
    %v886 = vld [vmem:[%s5 + $0x20] sm:$0xf]
    %v887 = vld [vmem:[%s5 + $0x24] sm:$0xf]
    %v888 = vld [vmem:[%s5 + $0x28] sm:$0xf]
    %v889 = vld [vmem:[%s5 + $0x2c] sm:$0xf]
    %v890 = vld [vmem:[%s5 + $0x30] sm:$0xf]
    %v891 = vld [vmem:[%s5 + $0x34] sm:$0xf]
    %v892 = vld [vmem:[%s5 + $0x38] sm:$0xf]
    %v893 = vld [vmem:[%s5 + $0x3c] sm:$0xf]
    %v894 = vld [vmem:[%s5 + $0x40] sm:$0xf]
    %v895 = vld [vmem:[%s5 + $0x44] sm:$0xf]
    %v896 = vld [vmem:[%s5 + $0x48] sm:$0xf]
    %v897 = vld [vmem:[%s5 + $0x4c] sm:$0xf]
    %v898 = vld [vmem:[%s5 + $0x50] sm:$0xf]
    %v899 = vld [vmem:[%s5 + $0x54] sm:$0xf]
    %v900 = vld [vmem:[%s5 + $0x58] sm:$0xf]
    %v901 = vld [vmem:[%s5 + $0x5c] sm:$0xf]
    %v902 = vld [vmem:[%s5 + $0x60] sm:$0xf]
    %v903 = vld [vmem:[%s5 + $0x64] sm:$0xf]
    %v904 = vld [vmem:[%s5 + $0x68] sm:$0xf]
    %v905 = vld [vmem:[%s5 + $0x6c] sm:$0xf]
    %v906 = vld [vmem:[%s5 + $0x70] sm:$0xf]
    %v907 = vld [vmem:[%s5 + $0x74] sm:$0xf]
    %v908 = vld [vmem:[%s5 + $0x78] sm:$0xf]
    %v909 = vld [vmem:[%s5 + $0x7c] sm:$0xf]
    %v910 = vld [vmem:[%s6] sm:$0x1]
    %v912 = vlaneseq
    %v913 = vshrl.u32 %v912, 7
    %v914 = vsub.s32 0, %v913
    %v915 = vrot.slane %v910, %v914
    %v949 = vunpack.c.l.b16 %v878
    %v950 = vunpack.c.l.b16 %v879
    %v951 = vunpack.c.l.b16 %v880
    %v952 = vunpack.c.l.b16 %v881
    %v953 = vunpack.c.l.b16 %v882
    %v954 = vunpack.c.l.b16 %v883
    %v955 = vunpack.c.l.b16 %v884
    %v956 = vunpack.c.l.b16 %v885
    %v957 = vunpack.c.l.b16 %v886
    %v958 = vunpack.c.l.b16 %v887
    %v959 = vunpack.c.l.b16 %v888
    %v960 = vunpack.c.l.b16 %v889
    %v961 = vunpack.c.l.b16 %v890
    %v962 = vunpack.c.l.b16 %v891
    %v963 = vunpack.c.l.b16 %v892
    %v964 = vunpack.c.l.b16 %v893
    %v965 = vunpack.c.l.b16 %v894
    %v966 = vunpack.c.l.b16 %v895
    %v967 = vunpack.c.l.b16 %v896
    %v968 = vunpack.c.l.b16 %v897
    %v969 = vunpack.c.l.b16 %v898
    %v970 = vunpack.c.l.b16 %v899
    %v971 = vunpack.c.l.b16 %v900
    %v972 = vunpack.c.l.b16 %v901
    %v973 = vunpack.c.l.b16 %v902
    %v974 = vunpack.c.l.b16 %v903
    %v975 = vunpack.c.l.b16 %v904
    %v976 = vunpack.c.l.b16 %v905
    %v977 = vunpack.c.l.b16 %v906
    %v978 = vunpack.c.l.b16 %v907
    %v979 = vunpack.c.l.b16 %v908
    %v980 = vunpack.c.l.b16 %v909
    %v981 = vpack.c.b16 %v950, %v949
    %v982 = vpack.c.b16 %v952, %v951
    %v983 = vpack.c.b16 %v954, %v953
    %v984 = vpack.c.b16 %v956, %v955
    %v985 = vpack.c.b16 %v958, %v957
    %v986 = vpack.c.b16 %v960, %v959
    %v987 = vpack.c.b16 %v962, %v961
    %v988 = vpack.c.b16 %v964, %v963
    %v989 = vpack.c.b16 %v966, %v965
    %v990 = vpack.c.b16 %v968, %v967
    %v991 = vpack.c.b16 %v970, %v969
    %v992 = vpack.c.b16 %v972, %v971
    %v993 = vpack.c.b16 %v974, %v973
    %v994 = vpack.c.b16 %v976, %v975
    %v995 = vpack.c.b16 %v978, %v977
    %v996 = vpack.c.b16 %v980, %v979
    %1013 = vmatprep.subr.bf16.mxu0 0
    %1014 = vmatpush1.bf16.msra.mxu0 %v981
    %1015 = vmatprep.subr.bf16.mxu0 0
    %1016 = vmatpush1.bf16.msra.mxu0 %v982
    %1017 = vmatprep.subr.bf16.mxu0 0
    %1018 = vmatpush1.bf16.msra.mxu0 %v983
    %1019 = vmatprep.subr.bf16.mxu0 0
    %1020 = vmatpush1.bf16.msra.mxu0 %v984
    %1021 = vmatprep.subr.bf16.mxu0 0
    %1022 = vmatpush1.bf16.msra.mxu0 %v985
    %1023 = vmatprep.subr.bf16.mxu0 0
    %1024 = vmatpush1.bf16.msra.mxu0 %v986
    %1025 = vmatprep.subr.bf16.mxu0 0
    %1026 = vmatpush1.bf16.msra.mxu0 %v987
    %1027 = vmatprep.subr.bf16.mxu0 0
    %1028 = vmatpush1.bf16.msra.mxu0 %v988
    %1029 = vmatprep.subr.bf16.mxu0 0
    %1030 = vmatpush1.bf16.msra.mxu0 %v989
    %1031 = vmatprep.subr.bf16.mxu0 0
    %1032 = vmatpush1.bf16.msra.mxu0 %v990
    %1033 = vmatprep.subr.bf16.mxu0 0
    %1034 = vmatpush1.bf16.msra.mxu0 %v991
    %1035 = vmatprep.subr.bf16.mxu0 0
    %1036 = vmatpush1.bf16.msra.mxu0 %v992
    %1037 = vmatprep.subr.bf16.mxu0 0
    %1038 = vmatpush1.bf16.msra.mxu0 %v993
    %1039 = vmatprep.subr.bf16.mxu0 0
    %1040 = vmatpush1.bf16.msra.mxu0 %v994
    %1041 = vmatprep.subr.bf16.mxu0 0
    %1042 = vmatpush1.bf16.msra.mxu0 %v995
    %1043 = vmatprep.subr.bf16.mxu0 0
    %1044 = vmatpush1.bf16.msra.mxu0 %v996
    %1045 = vmatprep.mubr.bf16.mxu0 %v877
    %1046 = vmatmul.mubr.bf16.gmra.mrb[0].mxu0 %v876
    %v1047 = vpop.f32.mrb[0].mxu0
    %v1048 = vadd.f32 %v915, %v1047
    %v1049 = vpop.f32.mrb[0].mxu0
    %v1050 = vpop.f32.mrb[0].mxu0
    %v1051 = vpop.f32.mrb[0].mxu0
    %1052 = vdwg.mxu0
    %v1053 = vmax.f32 %v1048, 0.0
    %v1054 = vpack.c.bf16 %v1053, %v1053
    %v1055 = vld [vmem:[%s7] sm:$0xf]
    %v1056 = vld [vmem:[%s7 + $0x4] sm:$0xf]
    %v1057 = vld [vmem:[%s7 + $0x8] sm:$0xf]
    %v1058 = vld [vmem:[%s7 + $0xc] sm:$0xf]
    %v1059 = vld [vmem:[%s7 + $0x10] sm:$0xf]
    %v1060 = vld [vmem:[%s7 + $0x14] sm:$0xf]
    %v1061 = vld [vmem:[%s7 + $0x18] sm:$0xf]
    %v1062 = vld [vmem:[%s7 + $0x1c] sm:$0xf]
    %v1063 = vld [vmem:[%s8] sm:$0x1]
    %v1065 = vlaneseq
    %v1066 = vshrl.u32 %v1065, 7
    %v1067 = vsub.s32 0, %v1066
    %v1068 = vrot.slane %v1063, %v1067
    %v1078 = vunpack.c.l.b16 %v1055
    %v1079 = vunpack.c.l.b16 %v1056
    %v1080 = vunpack.c.l.b16 %v1057
    %v1081 = vunpack.c.l.b16 %v1058
    %v1082 = vunpack.c.l.b16 %v1059
    %v1083 = vunpack.c.l.b16 %v1060
    %v1084 = vunpack.c.l.b16 %v1061
    %v1085 = vunpack.c.l.b16 %v1062
    %v1086 = vpack.c.b16 %v1079, %v1078
    %v1087 = vpack.c.b16 %v1081, %v1080
    %v1088 = vpack.c.b16 %v1083, %v1082
    %v1089 = vpack.c.b16 %v1085, %v1084
    %vm1094 = vcmask 523264
    %v1096 = vsel %vm1094, %v1054, 0
    %1098 = vmatprep.subr.bf16.mxu0 0
    %1099 = vmatpush1.bf16.msra.mxu0 %v1086
    %1100 = vmatprep.subr.bf16.mxu0 0
    %1101 = vmatpush1.bf16.msra.mxu0 %v1087
    %1102 = vmatprep.subr.bf16.mxu0 0
    %1103 = vmatpush1.bf16.msra.mxu0 %v1088
    %1104 = vmatprep.subr.bf16.mxu0 0
    %1105 = vmatpush1.bf16.msra.mxu0 %v1089
    %1106 = vmatprep.subr.bf16.mxu0 0
    %1107 = vmatpush1.bf16.msra.mxu0 0
    %1108 = vmatprep.subr.bf16.mxu0 0
    %1109 = vmatpush1.bf16.msra.mxu0 0
    %1110 = vmatprep.subr.bf16.mxu0 0
    %1111 = vmatpush1.bf16.msra.mxu0 0
    %1112 = vmatprep.subr.bf16.mxu0 0
    %1113 = vmatpush1.bf16.msra.mxu0 0
    %1114 = vmatprep.subr.bf16.mxu0 0
    %1115 = vmatpush1.bf16.msra.mxu0 0
    %1116 = vmatprep.subr.bf16.mxu0 0
    %1117 = vmatpush1.bf16.msra.mxu0 0
    %1118 = vmatprep.subr.bf16.mxu0 0
    %1119 = vmatpush1.bf16.msra.mxu0 0
    %1120 = vmatprep.subr.bf16.mxu0 0
    %1121 = vmatpush1.bf16.msra.mxu0 0
    %1122 = vmatprep.subr.bf16.mxu0 0
    %1123 = vmatpush1.bf16.msra.mxu0 0
    %1124 = vmatprep.subr.bf16.mxu0 0
    %1125 = vmatpush1.bf16.msra.mxu0 0
    %1126 = vmatprep.subr.bf16.mxu0 0
    %1127 = vmatpush1.bf16.msra.mxu0 0
    %1128 = vmatprep.subr.bf16.mxu0 0
    %1129 = vmatpush1.bf16.msra.mxu0 0
    %1130 = vmatprep.mubr.bf16.mxu0 0
    %1131 = vmatmul.mubr.bf16.gmra.mrb[0].mxu0 %v1096
    %v1132 = vpop.f32.mrb[0].mxu0
    %v1133 = vadd.f32 %v1068, %v1132
    %v1134 = vpop.f32.mrb[0].mxu0
    %v1135 = vpop.f32.mrb[0].mxu0
    %v1136 = vpop.f32.mrb[0].mxu0
    %1137 = vdwg.mxu0
    %vm1138 = vcmask 25600
    %1139 = vst.msk [vmem:[#allocation2] sm:$0x3] %vm1138, %v1133
    %v1140 = vld [vmem:[%s2] sm:$0xff]
    %v1141 = vld [vmem:[%s2 + $0x8] sm:$0xff]
    %v1142 = vld [vmem:[%s2 + $0x10] sm:$0xff]
    %v1143 = vld [vmem:[%s2 + $0x18] sm:$0xff]
    %v1144 = vld [vmem:[%s2 + $0x20] sm:$0xff]
    %vm1145 = vcmask 15360
    %v1147 = vsel %vm1145, %v1140, 0
    %v1150 = vsel %vm1145, %v1141, 0
    %v1153 = vsel %vm1145, %v1142, 0
    %v1156 = vsel %vm1145, %v1143, 0
    %v1159 = vsel %vm1145, %v1144, 0
    %vm1161 = vcmask 1041408
    %v1163 = vsel %vm1161, %v1133, 0
    %1165 = vmatprep.subr.mxu0 0.0
    %1166 = vmatpush1.msra.mxu0 %v1163
    %1167 = vmatprep.subr.mxu0 0.0
    %1168 = vmatpush1.msra.mxu0 0.0
    %1169 = vmatprep.subr.mxu0 0.0
    %1170 = vmatpush1.msra.mxu0 0.0
    %1171 = vmatprep.subr.mxu0 0.0
    %1172 = vmatpush1.msra.mxu0 0.0
    %1173 = vmatprep.subr.mxu0 0.0
    %1174 = vmatpush1.msra.mxu0 0.0
    %1175 = vmatprep.subr.mxu0 0.0
    %1176 = vmatpush1.msra.mxu0 0.0
    %1177 = vmatprep.subr.mxu0 0.0
    %1178 = vmatpush1.msra.mxu0 0.0
    %1179 = vmatprep.subr.mxu0 0.0
    %1180 = vmatpush1.msra.mxu0 0.0
    %1181 = vmatprep.subr.mxu0 0.0
    %1182 = vmatpush1.msra.mxu0 0.0
    %1183 = vmatprep.subr.mxu0 0.0
    %1184 = vmatpush1.msra.mxu0 0.0
    %1185 = vmatprep.subr.mxu0 0.0
    %1186 = vmatpush1.msra.mxu0 0.0
    %1187 = vmatprep.subr.mxu0 0.0
    %1188 = vmatpush1.msra.mxu0 0.0
    %1189 = vmatprep.subr.mxu0 0.0
    %1190 = vmatpush1.msra.mxu0 0.0
    %1191 = vmatprep.subr.mxu0 0.0
    %1192 = vmatpush1.msra.mxu0 0.0
    %1193 = vmatprep.subr.mxu0 0.0
    %1194 = vmatpush1.msra.mxu0 0.0
    %1195 = vmatprep.subr.mxu0 0.0
    %1196 = vmatpush1.msra.mxu0 0.0
    %1197 = vmatprep.subr.mxu0 0.0
    %1198 = vmatpush1.msra.mxu0 0.0
    %1199 = vmatprep.subr.mxu0 0.0
    %1200 = vmatpush1.msra.mxu0 0.0
    %1201 = vmatprep.subr.mxu0 0.0
    %1202 = vmatpush1.msra.mxu0 0.0
    %1203 = vmatprep.subr.mxu0 0.0
    %1204 = vmatpush1.msra.mxu0 0.0
    %1205 = vmatprep.subr.mxu0 0.0
    %1206 = vmatpush1.msra.mxu0 0.0
    %1207 = vmatprep.subr.mxu0 0.0
    %1208 = vmatpush1.msra.mxu0 0.0
    %1209 = vmatprep.subr.mxu0 0.0
    %1210 = vmatpush1.msra.mxu0 0.0
    %1211 = vmatprep.subr.mxu0 0.0
    %1212 = vmatpush1.msra.mxu0 0.0
    %1213 = vmatprep.subr.mxu0 0.0
    %1214 = vmatpush1.msra.mxu0 0.0
    %1215 = vmatprep.subr.mxu0 0.0
    %1216 = vmatpush1.msra.mxu0 0.0
    %1217 = vmatprep.subr.mxu0 0.0
    %1218 = vmatpush1.msra.mxu0 0.0
    %1219 = vmatprep.subr.mxu0 0.0
    %1220 = vmatpush1.msra.mxu0 0.0
    %1221 = vmatprep.subr.mxu0 0.0
    %1222 = vmatpush1.msra.mxu0 0.0
    %1223 = vmatprep.subr.mxu0 0.0
    %1224 = vmatpush1.msra.mxu0 0.0
    %1225 = vmatprep.subr.mxu0 0.0
    %1226 = vmatpush1.msra.mxu0 0.0
    %1227 = vmatprep.subr.mxu0 0.0
    %1228 = vmatpush1.msra.mxu0 0.0
    %1229 = vmatprep.mubr.f32.mxu0 0.0
    %1230 = vmatmul.mubr.f32.gmra.mrb[0].mxu0 %v1147
    %v1231 = vpop.f32.mrb[0].mxu0
    %v1232 = vadd.f32 0.0, %v1231
    %v1233 = vpop.f32.mrb[0].mxu0
    %1234 = vmatprep.mubr.f32.mxu0 0.0
    %1235 = vmatmul.mubr.f32.gmra.mrb[0].mxu0 %v1150
    %v1236 = vpop.f32.mrb[0].mxu0
    %v1237 = vadd.f32 0.0, %v1236
    %v1238 = vpop.f32.mrb[0].mxu0
    %1239 = vmatprep.mubr.f32.mxu0 0.0
    %1240 = vmatmul.mubr.f32.gmra.mrb[0].mxu0 %v1153
    %v1241 = vpop.f32.mrb[0].mxu0
    %v1242 = vadd.f32 0.0, %v1241
    %v1243 = vpop.f32.mrb[0].mxu0
    %1244 = vmatprep.mubr.f32.mxu0 0.0
    %1245 = vmatmul.mubr.f32.gmra.mrb[0].mxu0 %v1156
    %v1246 = vpop.f32.mrb[0].mxu0
    %v1247 = vadd.f32 0.0, %v1246
    %v1248 = vpop.f32.mrb[0].mxu0
    %1249 = vmatprep.mubr.f32.mxu0 0.0
    %1250 = vmatmul.mubr.f32.gmra.mrb[0].mxu0 %v1159
    %v1251 = vpop.f32.mrb[0].mxu0
    %v1252 = vadd.f32 0.0, %v1251
    %v1253 = vpop.f32.mrb[0].mxu0
    %1254 = vdwg.mxu0
    %v1255 = vmul.f32 %v1232, 0.5
    %v1256 = vmul.f32 %v1237, 0.5
    %v1257 = vmul.f32 %v1242, 0.5
    %v1258 = vmul.f32 %v1247, 0.5
    %v1259 = vmul.f32 %v1252, 0.5
    %v1260 = vmul.f32 %v1255, 1.442695
    %v1261 = vpow.pop %v1260
    %v1262 = vmul.f32 %v1256, 1.442695
    %v1263 = vpow.pop %v1262
    %v1264 = vmul.f32 %v1257, 1.442695
    %v1265 = vpow.pop %v1264
    %v1266 = vmul.f32 %v1258, 1.442695
    %v1267 = vpow.pop %v1266
    %v1268 = vmul.f32 %v1259, 1.442695
    %v1269 = vpow.pop %v1268
    %v1270 = vld [vmem:[%s1] sm:$0xff]
    %v1271 = vld [vmem:[%s1 + $0x8] sm:$0xff]
    %v1272 = vld [vmem:[%s1 + $0x10] sm:$0xff]
    %v1273 = vld [vmem:[%s1 + $0x18] sm:$0xff]
    %v1274 = vld [vmem:[%s1 + $0x20] sm:$0xff]
    %1280 = vrot.lane.b32.xlu0 %v1270, 2
    %v1281 = vpop.permute.xlu0 %1280
    %1282 = vrot.lane.b32.xlu0 %v1271, 2
    %v1283 = vpop.permute.xlu0 %1282
    %1284 = vrot.lane.b32.xlu0 %v1272, 2
    %v1285 = vpop.permute.xlu0 %1284
    %1286 = vrot.lane.b32.xlu0 %v1273, 2
    %v1287 = vpop.permute.xlu0 %1286
    %1288 = vrot.lane.b32.xlu0 %v1274, 2
    %v1289 = vpop.permute.xlu0 %1288
    %v1295 = vmul.f32 %v1261, %v1281
    %v1296 = vmul.f32 %v1263, %v1283
    %v1297 = vmul.f32 %v1265, %v1285
    %v1298 = vmul.f32 %v1267, %v1287
    %v1299 = vmul.f32 %v1269, %v1289
    %1305 = vrot.lane.b32.xlu0 %v1295, 126
    %v1306 = vpop.permute.xlu0 %1305
    %1307 = vrot.lane.b32.xlu0 %v1296, 126
    %v1308 = vpop.permute.xlu0 %1307
    %1309 = vrot.lane.b32.xlu0 %v1297, 126
    %v1310 = vpop.permute.xlu0 %1309
    %1311 = vrot.lane.b32.xlu0 %v1298, 126
    %v1312 = vpop.permute.xlu0 %1311
    %1313 = vrot.lane.b32.xlu0 %v1299, 126
    %v1314 = vpop.permute.xlu0 %1313
    %v1320 = vadd.f32 %v1232, %v1306
    %v1321 = vadd.f32 %v1237, %v1308
    %v1322 = vadd.f32 %v1242, %v1310
    %v1323 = vadd.f32 %v1247, %v1312
    %v1324 = vadd.f32 %v1252, %v1314
    %v1325 = vld [vmem:[%s9] sm:$0x3]
    %v1326 = vld [vmem:[%s10] sm:$0x1]
    %1328 = vset.pattern.permute.xlu0 0
    %1329 = vperm.xlu0 %1328, %v1320
    %v1330 = vpop.permute.xlu0 %1329
    %1333 = vset.pattern.permute.xlu0 0
    %1334 = vperm.xlu0 %1333, %v1321
    %v1335 = vpop.permute.xlu0 %1334
    %1338 = vset.pattern.permute.xlu0 0
    %1339 = vperm.xlu0 %1338, %v1322
    %v1340 = vpop.permute.xlu0 %1339
    %1343 = vset.pattern.permute.xlu0 0
    %1344 = vperm.xlu0 %1343, %v1323
    %v1345 = vpop.permute.xlu0 %1344
    %1348 = vset.pattern.permute.xlu0 0
    %1349 = vperm.xlu0 %1348, %v1324
    %v1350 = vpop.permute.xlu0 %1349
    %v1352 = vlaneseq
    %v1353 = vshrl.u32 %v1352, 7
    %v1354 = vsub.s32 0, %v1353
    %v1355 = vrot.slane %v1325, %v1354
    %v1356 = vmul.f32 %v1330, %v1355
    %v1357 = vmul.f32 %v1335, %v1355
    %v1358 = vmul.f32 %v1340, %v1355
    %v1359 = vmul.f32 %v1345, %v1355
    %v1360 = vmul.f32 %v1350, %v1355
    %v1362 = vlaneseq
    %v1363 = vshrl.u32 %v1362, 7
    %v1364 = vsub.s32 0, %v1363
    %v1365 = vrot.slane %v1326, %v1364
    %v1367 = vadd.f32 %v1365, %v1356
    %v1368 = vadd.f32 %v1365, %v1357
    %v1369 = vadd.f32 %v1365, %v1358
    %v1370 = vadd.f32 %v1365, %v1359
    %v1371 = vadd.f32 %v1365, %v1360
    %1372 = vset.pattern.permute.xlu0 1
    %1373 = vperm.xlu0 %1372, %v1320
    %v1374 = vpop.permute.xlu0 %1373
    %1376 = vset.pattern.permute.xlu0 1
    %1377 = vperm.xlu0 %1376, %v1321
    %v1378 = vpop.permute.xlu0 %1377
    %1380 = vset.pattern.permute.xlu0 1
    %1381 = vperm.xlu0 %1380, %v1322
    %v1382 = vpop.permute.xlu0 %1381
    %1384 = vset.pattern.permute.xlu0 1
    %1385 = vperm.xlu0 %1384, %v1323
    %v1386 = vpop.permute.xlu0 %1385
    %1388 = vset.pattern.permute.xlu0 1
    %1389 = vperm.xlu0 %1388, %v1324
    %v1390 = vpop.permute.xlu0 %1389
    %v1392 = vlaneseq
    %v1393 = vshrl.u32 %v1392, 7
    %v1394 = vsub.s32 1, %v1393
    %v1395 = vrot.slane %v1325, %v1394
    %v1396 = vmul.f32 %v1374, %v1395
    %v1397 = vmul.f32 %v1378, %v1395
    %v1398 = vmul.f32 %v1382, %v1395
    %v1399 = vmul.f32 %v1386, %v1395
    %v1400 = vmul.f32 %v1390, %v1395
    %v1401 = vadd.f32 %v1367, %v1396
    %v1402 = vadd.f32 %v1368, %v1397
    %v1403 = vadd.f32 %v1369, %v1398
    %v1404 = vadd.f32 %v1370, %v1399
    %v1405 = vadd.f32 %v1371, %v1400
    %v1406 = vmax.f32 %v1401, 0.0
    %v1407 = vmax.f32 %v1402, 0.0
    %v1408 = vmax.f32 %v1403, 0.0
    %v1409 = vmax.f32 %v1404, 0.0
    %v1410 = vmax.f32 %v1405, 0.0
    %v1411 = vpack.c.bf16 %v1407, %v1406
    %v1412 = vpack.c.bf16 %v1409, %v1408
    %v1413 = vpack.c.bf16 %v1410, %v1410
    %v1414 = vld [vmem:[%s11] sm:$0xff]
    %v1415 = vld [vmem:[%s11 + $0x8] sm:$0xff]
    %v1416 = vld [vmem:[%s11 + $0x10] sm:$0xff]
    %v1417 = vld [vmem:[%s11 + $0x18] sm:$0xff]
    %v1418 = vld [vmem:[%s11 + $0x20] sm:$0xff]
    %v1419 = vld [vmem:[%s11 + $0x28] sm:$0xff]
    %v1420 = vld [vmem:[%s11 + $0x30] sm:$0xff]
    %v1421 = vld [vmem:[%s11 + $0x38] sm:$0xff]
    %v1422 = vld [vmem:[%s12] sm:$0x3]
    %v1424 = vlaneseq
    %v1425 = vshrl.u32 %v1424, 7
    %v1426 = vsub.s32 0, %v1425
    %v1427 = vrot.slane %v1422, %v1426
    %v1428 = vlaneseq
    %v1429 = vshrl.u32 %v1428, 7
    %v1430 = vsub.s32 1, %v1429
    %v1431 = vrot.slane %v1422, %v1430
    %v1442 = vunpack.c.l.b16 %v1414
    %v1443 = vunpack.c.h.b16 %v1414
    %v1444 = vunpack.c.l.b16 %v1415
    %v1445 = vunpack.c.h.b16 %v1415
    %v1446 = vunpack.c.l.b16 %v1416
    %v1447 = vunpack.c.h.b16 %v1416
    %v1448 = vunpack.c.l.b16 %v1417
    %v1449 = vunpack.c.h.b16 %v1417
    %v1450 = vunpack.c.l.b16 %v1418
    %v1451 = vunpack.c.h.b16 %v1418
    %v1452 = vunpack.c.l.b16 %v1419
    %v1453 = vunpack.c.h.b16 %v1419
    %v1454 = vunpack.c.l.b16 %v1420
    %v1455 = vunpack.c.h.b16 %v1420
    %v1456 = vunpack.c.l.b16 %v1421
    %v1457 = vunpack.c.h.b16 %v1421
    %v1458 = vpack.c.b16 %v1444, %v1442
    %v1459 = vpack.c.b16 %v1445, %v1443
    %v1460 = vpack.c.b16 %v1448, %v1446
    %v1461 = vpack.c.b16 %v1449, %v1447
    %v1462 = vpack.c.b16 %v1452, %v1450
    %v1463 = vpack.c.b16 %v1453, %v1451
    %v1464 = vpack.c.b16 %v1456, %v1454
    %v1465 = vpack.c.b16 %v1457, %v1455
    %v1475 = vsel %vm1094, %v1411, 0
    %v1478 = vsel %vm1094, %v1412, 0
    %v1481 = vsel %vm1094, %v1413, 0
    %1483 = vmatprep.subr.bf16.mxu0 %v1459
    %1484 = vmatpush1.bf16.msra.mxu0 %v1458
    %1485 = vmatprep.subr.bf16.mxu0 %v1461
    %1486 = vmatpush1.bf16.msra.mxu0 %v1460
    %1487 = vmatprep.subr.bf16.mxu0 %v1463
    %1488 = vmatpush1.bf16.msra.mxu0 %v1462
    %1489 = vmatprep.subr.bf16.mxu0 %v1465
    %1490 = vmatpush1.bf16.msra.mxu0 %v1464
    %1491 = vmatprep.subr.bf16.mxu0 0
    %1492 = vmatpush1.bf16.msra.mxu0 0
    %1493 = vmatprep.subr.bf16.mxu0 0
    %1494 = vmatpush1.bf16.msra.mxu0 0
    %1495 = vmatprep.subr.bf16.mxu0 0
    %1496 = vmatpush1.bf16.msra.mxu0 0
    %1497 = vmatprep.subr.bf16.mxu0 0
    %1498 = vmatpush1.bf16.msra.mxu0 0
    %1499 = vmatprep.subr.bf16.mxu0 0
    %1500 = vmatpush1.bf16.msra.mxu0 0
    %1501 = vmatprep.subr.bf16.mxu0 0
    %1502 = vmatpush1.bf16.msra.mxu0 0
    %1503 = vmatprep.subr.bf16.mxu0 0
    %1504 = vmatpush1.bf16.msra.mxu0 0
    %1505 = vmatprep.subr.bf16.mxu0 0
    %1506 = vmatpush1.bf16.msra.mxu0 0
    %1507 = vmatprep.subr.bf16.mxu0 0
    %1508 = vmatpush1.bf16.msra.mxu0 0
    %1509 = vmatprep.subr.bf16.mxu0 0
    %1510 = vmatpush1.bf16.msra.mxu0 0
    %1511 = vmatprep.subr.bf16.mxu0 0
    %1512 = vmatpush1.bf16.msra.mxu0 0
    %1513 = vmatprep.subr.bf16.mxu0 0
    %1514 = vmatpush1.bf16.msra.mxu0 0
    %1515 = vmatprep.mubr.bf16.mxu0 0
    %1516 = vmatmul.mubr.bf16.gmra.mrb[0].mxu0 %v1475
    %v1517 = vpop.f32.mrb[0].mxu0
    %v1518 = vadd.f32 %v1427, %v1517
    %v1519 = vpop.f32.mrb[0].mxu0
    %v1520 = vadd.f32 %v1431, %v1519
    %v1521 = vpop.f32.mrb[0].mxu0
    %v1522 = vadd.f32 %v1427, %v1521
    %v1523 = vpop.f32.mrb[0].mxu0
    %v1524 = vadd.f32 %v1431, %v1523
    %1525 = vmatprep.mubr.bf16.mxu0 0
    %1526 = vmatmul.mubr.bf16.gmra.mrb[0].mxu0 %v1478
    %v1527 = vpop.f32.mrb[0].mxu0
    %v1528 = vadd.f32 %v1427, %v1527
    %v1529 = vpop.f32.mrb[0].mxu0
    %v1530 = vadd.f32 %v1431, %v1529
    %v1531 = vpop.f32.mrb[0].mxu0
    %v1532 = vadd.f32 %v1427, %v1531
    %v1533 = vpop.f32.mrb[0].mxu0
    %v1534 = vadd.f32 %v1431, %v1533
    %1535 = vmatprep.mubr.bf16.mxu0 0
    %1536 = vmatmul.mubr.bf16.gmra.mrb[0].mxu0 %v1481
    %v1537 = vpop.f32.mrb[0].mxu0
    %v1538 = vadd.f32 %v1427, %v1537
    %v1539 = vpop.f32.mrb[0].mxu0
    %v1540 = vadd.f32 %v1431, %v1539
    %v1541 = vpop.f32.mrb[0].mxu0
    %v1542 = vpop.f32.mrb[0].mxu0
    %1543 = vdwg.mxu0
    %v1544 = vmax.f32 %v1518, 0.0
    %v1545 = vmax.f32 %v1520, 0.0
    %v1546 = vmax.f32 %v1522, 0.0
    %v1547 = vmax.f32 %v1524, 0.0
    %v1548 = vmax.f32 %v1528, 0.0
    %v1549 = vmax.f32 %v1530, 0.0
    %v1550 = vmax.f32 %v1532, 0.0
    %v1551 = vmax.f32 %v1534, 0.0
    %v1552 = vmax.f32 %v1538, 0.0
    %v1553 = vmax.f32 %v1540, 0.0
    %v1554 = vpack.c.bf16 %v1546, %v1544
    %v1555 = vpack.c.bf16 %v1547, %v1545
    %v1556 = vpack.c.bf16 %v1550, %v1548
    %v1557 = vpack.c.bf16 %v1551, %v1549
    %v1558 = vpack.c.bf16 %v1552, %v1552
    %v1559 = vpack.c.bf16 %v1553, %v1553
    %v1560 = vld [vmem:[%s13] sm:$0xff]
    %v1561 = vld [vmem:[%s13 + $0x8] sm:$0xff]
    %v1562 = vld [vmem:[%s13 + $0x10] sm:$0xff]
    %v1563 = vld [vmem:[%s13 + $0x18] sm:$0xf]
    %v1564 = vld [vmem:[%s13 + $0x1c] sm:$0xff]
    %v1565 = vld [vmem:[%s13 + $0x24] sm:$0xff]
    %v1566 = vld [vmem:[%s13 + $0x2c] sm:$0xff]
    %v1567 = vld [vmem:[%s13 + $0x34] sm:$0xf]
    %v1568 = vld [vmem:[%s13 + $0x38] sm:$0xff]
    %v1569 = vld [vmem:[%s13 + $0x40] sm:$0xff]
    %v1570 = vld [vmem:[%s13 + $0x48] sm:$0xff]
    %v1571 = vld [vmem:[%s13 + $0x50] sm:$0xf]
    %v1572 = vld [vmem:[%s13 + $0x54] sm:$0xff]
    %v1573 = vld [vmem:[%s13 + $0x5c] sm:$0xff]
    %v1574 = vld [vmem:[%s13 + $0x64] sm:$0xff]
    %v1575 = vld [vmem:[%s13 + $0x6c] sm:$0xf]
    %v1576 = vld [vmem:[%s13 + $0x70] sm:$0xff]
    %v1577 = vld [vmem:[%s13 + $0x78] sm:$0xff]
    %v1578 = vld [vmem:[%s13 + $0x80] sm:$0xff]
    %v1579 = vld [vmem:[%s13 + $0x88] sm:$0xf]
    %v1580 = vld [vmem:[%s13 + $0x8c] sm:$0xff]
    %v1581 = vld [vmem:[%s13 + $0x94] sm:$0xff]
    %v1582 = vld [vmem:[%s13 + $0x9c] sm:$0xff]
    %v1583 = vld [vmem:[%s13 + $0xa4] sm:$0xf]
    %v1584 = vld [vmem:[%s13 + $0xa8] sm:$0xff]
    %v1585 = vld [vmem:[%s13 + $0xb0] sm:$0xff]
    %v1586 = vld [vmem:[%s13 + $0xb8] sm:$0xff]
    %v1587 = vld [vmem:[%s13 + $0xc0] sm:$0xf]
    %v1588 = vld [vmem:[%s13 + $0xc4] sm:$0xff]
    %v1589 = vld [vmem:[%s13 + $0xcc] sm:$0xff]
    %v1590 = vld [vmem:[%s13 + $0xd4] sm:$0xff]
    %v1591 = vld [vmem:[%s13 + $0xdc] sm:$0xf]
    %v1592 = vld [vmem:[%s13 + $0xe0] sm:$0xff]
    %v1593 = vld [vmem:[%s13 + $0xe8] sm:$0xff]
    %v1594 = vld [vmem:[%s13 + $0xf0] sm:$0xff]
    %v1595 = vld [vmem:[%s13 + $0xf8] sm:$0xf]
    %v1596 = vld [vmem:[%s13 + $0xfc] sm:$0xff]
    %v1597 = vld [vmem:[%s13 + $0x104] sm:$0xff]
    %v1598 = vld [vmem:[%s13 + $0x10c] sm:$0xff]
    %v1599 = vld [vmem:[%s13 + $0x114] sm:$0xf]
    %v1600 = vld [vmem:[%s13 + $0x118] sm:$0xff]
    %v1601 = vld [vmem:[%s13 + $0x120] sm:$0xff]
    %v1602 = vld [vmem:[%s13 + $0x128] sm:$0xff]
    %v1603 = vld [vmem:[%s13 + $0x130] sm:$0xf]
    %v1604 = vld [vmem:[%s13 + $0x134] sm:$0xff]
    %v1605 = vld [vmem:[%s13 + $0x13c] sm:$0xff]
    %v1606 = vld [vmem:[%s13 + $0x144] sm:$0xff]
    %v1607 = vld [vmem:[%s13 + $0x14c] sm:$0xf]
    %v1608 = vld [vmem:[%s13 + $0x150] sm:$0xff]
    %v1609 = vld [vmem:[%s13 + $0x158] sm:$0xff]
    %v1610 = vld [vmem:[%s13 + $0x160] sm:$0xff]
    %v1611 = vld [vmem:[%s13 + $0x168] sm:$0xf]
    %v1612 = vld [vmem:[%s13 + $0x16c] sm:$0xff]
    %v1613 = vld [vmem:[%s13 + $0x174] sm:$0xff]
    %v1614 = vld [vmem:[%s13 + $0x17c] sm:$0xff]
    %v1615 = vld [vmem:[%s13 + $0x184] sm:$0xf]
    %v1616 = vld [vmem:[%s13 + $0x188] sm:$0xff]
    %v1617 = vld [vmem:[%s13 + $0x190] sm:$0xff]
    %v1618 = vld [vmem:[%s13 + $0x198] sm:$0xff]
    %v1619 = vld [vmem:[%s13 + $0x1a0] sm:$0xf]
    %v1620 = vld [vmem:[%s13 + $0x1a4] sm:$0xff]
    %v1621 = vld [vmem:[%s13 + $0x1ac] sm:$0xff]
    %v1622 = vld [vmem:[%s13 + $0x1b4] sm:$0xff]
    %v1623 = vld [vmem:[%s13 + $0x1bc] sm:$0xf]
    %v1624 = vld [vmem:[%s13 + $0x1c0] sm:$0xff]
    %v1625 = vld [vmem:[%s13 + $0x1c8] sm:$0xff]
    %v1626 = vld [vmem:[%s13 + $0x1d0] sm:$0xff]
    %v1627 = vld [vmem:[%s13 + $0x1d8] sm:$0xf]
    %v1628 = vld [vmem:[%s13 + $0x1dc] sm:$0xff]
    %v1629 = vld [vmem:[%s13 + $0x1e4] sm:$0xff]
    %v1630 = vld [vmem:[%s13 + $0x1ec] sm:$0xff]
    %v1631 = vld [vmem:[%s13 + $0x1f4] sm:$0xf]
    %v1632 = vld [vmem:[%s13 + $0x1f8] sm:$0xff]
    %v1633 = vld [vmem:[%s13 + $0x200] sm:$0xff]
    %v1634 = vld [vmem:[%s13 + $0x208] sm:$0xff]
    %v1635 = vld [vmem:[%s13 + $0x210] sm:$0xf]
    %v1636 = vld [vmem:[%s13 + $0x214] sm:$0xff]
    %v1637 = vld [vmem:[%s13 + $0x21c] sm:$0xff]
    %v1638 = vld [vmem:[%s13 + $0x224] sm:$0xff]
    %v1639 = vld [vmem:[%s13 + $0x22c] sm:$0xf]
    %v1640 = vld [vmem:[%s13 + $0x230] sm:$0xff]
    %v1641 = vld [vmem:[%s13 + $0x238] sm:$0xff]
    %v1642 = vld [vmem:[%s13 + $0x240] sm:$0xff]
    %v1643 = vld [vmem:[%s13 + $0x248] sm:$0xf]
    %v1644 = vld [vmem:[%s13 + $0x24c] sm:$0xff]
    %v1645 = vld [vmem:[%s13 + $0x254] sm:$0xff]
    %v1646 = vld [vmem:[%s13 + $0x25c] sm:$0xff]
    %v1647 = vld [vmem:[%s13 + $0x264] sm:$0xf]
    %v1648 = vld [vmem:[%s13 + $0x268] sm:$0xff]
    %v1649 = vld [vmem:[%s13 + $0x270] sm:$0xff]
    %v1650 = vld [vmem:[%s13 + $0x278] sm:$0xff]
    %v1651 = vld [vmem:[%s13 + $0x280] sm:$0xf]
    %v1652 = vld [vmem:[%s13 + $0x284] sm:$0xff]
    %v1653 = vld [vmem:[%s13 + $0x28c] sm:$0xff]
    %v1654 = vld [vmem:[%s13 + $0x294] sm:$0xff]
    %v1655 = vld [vmem:[%s13 + $0x29c] sm:$0xf]
    %v1656 = vld [vmem:[%s13 + $0x2a0] sm:$0xff]
    %v1657 = vld [vmem:[%s13 + $0x2a8] sm:$0xff]
    %v1658 = vld [vmem:[%s13 + $0x2b0] sm:$0xff]
    %v1659 = vld [vmem:[%s13 + $0x2b8] sm:$0xf]
    %v1660 = vld [vmem:[%s13 + $0x2bc] sm:$0xff]
    %v1661 = vld [vmem:[%s13 + $0x2c4] sm:$0xff]
    %v1662 = vld [vmem:[%s13 + $0x2cc] sm:$0xff]
    %v1663 = vld [vmem:[%s13 + $0x2d4] sm:$0xf]
    %v1664 = vld [vmem:[%s13 + $0x2d8] sm:$0xff]
    %v1665 = vld [vmem:[%s13 + $0x2e0] sm:$0xff]
    %v1666 = vld [vmem:[%s13 + $0x2e8] sm:$0xff]
    %v1667 = vld [vmem:[%s13 + $0x2f0] sm:$0xf]
    %v1668 = vld [vmem:[%s13 + $0x2f4] sm:$0xff]
    %v1669 = vld [vmem:[%s13 + $0x2fc] sm:$0xff]
    %v1670 = vld [vmem:[%s13 + $0x304] sm:$0xff]
    %v1671 = vld [vmem:[%s13 + $0x30c] sm:$0xf]
    %v1672 = vld [vmem:[%s13 + $0x310] sm:$0xff]
    %v1673 = vld [vmem:[%s13 + $0x318] sm:$0xff]
    %v1674 = vld [vmem:[%s13 + $0x320] sm:$0xff]
    %v1675 = vld [vmem:[%s13 + $0x328] sm:$0xf]
    %v1676 = vld [vmem:[%s13 + $0x32c] sm:$0xff]
    %v1677 = vld [vmem:[%s13 + $0x334] sm:$0xff]
    %v1678 = vld [vmem:[%s13 + $0x33c] sm:$0xff]
    %v1679 = vld [vmem:[%s13 + $0x344] sm:$0xf]
    %v1680 = vld [vmem:[%s13 + $0x348] sm:$0xff]
    %v1681 = vld [vmem:[%s13 + $0x350] sm:$0xff]
    %v1682 = vld [vmem:[%s13 + $0x358] sm:$0xff]
    %v1683 = vld [vmem:[%s13 + $0x360] sm:$0xf]
    %v1684 = vld [vmem:[%s13 + $0x364] sm:$0xff]
    %v1685 = vld [vmem:[%s13 + $0x36c] sm:$0xff]
    %v1686 = vld [vmem:[%s13 + $0x374] sm:$0xff]
    %v1687 = vld [vmem:[%s13 + $0x37c] sm:$0xf]
    %v1688 = vld [vmem:[%s14] sm:$0x7f]
    %v1690 = vlaneseq
    %v1691 = vshrl.u32 %v1690, 7
    %v1692 = vsub.s32 0, %v1691
    %v1693 = vrot.slane %v1688, %v1692
    %v1694 = vlaneseq
    %v1695 = vshrl.u32 %v1694, 7
    %v1696 = vsub.s32 1, %v1695
    %v1697 = vrot.slane %v1688, %v1696
    %v1698 = vlaneseq
    %v1699 = vshrl.u32 %v1698, 7
    %v1700 = vsub.s32 2, %v1699
    %v1701 = vrot.slane %v1688, %v1700
    %v1702 = vlaneseq
    %v1703 = vshrl.u32 %v1702, 7
    %v1704 = vsub.s32 3, %v1703
    %v1705 = vrot.slane %v1688, %v1704
    %v1706 = vlaneseq
    %v1707 = vshrl.u32 %v1706, 7
    %v1708 = vsub.s32 4, %v1707
    %v1709 = vrot.slane %v1688, %v1708
    %v1710 = vlaneseq
    %v1711 = vshrl.u32 %v1710, 7
    %v1712 = vsub.s32 5, %v1711
    %v1713 = vrot.slane %v1688, %v1712
    %v1714 = vlaneseq
    %v1715 = vshrl.u32 %v1714, 7
    %v1716 = vsub.s32 6, %v1715
    %v1717 = vrot.slane %v1688, %v1716
    %v1853 = vunpack.c.l.b16 %v1560
    %v1854 = vunpack.c.h.b16 %v1560
    %v1855 = vunpack.c.l.b16 %v1561
    %v1856 = vunpack.c.h.b16 %v1561
    %v1857 = vunpack.c.l.b16 %v1562
    %v1858 = vunpack.c.h.b16 %v1562
    %v1859 = vunpack.c.l.b16 %v1563
    %v1860 = vunpack.c.l.b16 %v1564
    %v1861 = vunpack.c.h.b16 %v1564
    %v1862 = vunpack.c.l.b16 %v1565
    %v1863 = vunpack.c.h.b16 %v1565
    %v1864 = vunpack.c.l.b16 %v1566
    %v1865 = vunpack.c.h.b16 %v1566
    %v1866 = vunpack.c.l.b16 %v1567
    %v1867 = vunpack.c.l.b16 %v1568
    %v1868 = vunpack.c.h.b16 %v1568
    %v1869 = vunpack.c.l.b16 %v1569
    %v1870 = vunpack.c.h.b16 %v1569
    %v1871 = vunpack.c.l.b16 %v1570
    %v1872 = vunpack.c.h.b16 %v1570
    %v1873 = vunpack.c.l.b16 %v1571
    %v1874 = vunpack.c.l.b16 %v1572
    %v1875 = vunpack.c.h.b16 %v1572
    %v1876 = vunpack.c.l.b16 %v1573
    %v1877 = vunpack.c.h.b16 %v1573
    %v1878 = vunpack.c.l.b16 %v1574
    %v1879 = vunpack.c.h.b16 %v1574
    %v1880 = vunpack.c.l.b16 %v1575
    %v1881 = vunpack.c.l.b16 %v1576
    %v1882 = vunpack.c.h.b16 %v1576
    %v1883 = vunpack.c.l.b16 %v1577
    %v1884 = vunpack.c.h.b16 %v1577
    %v1885 = vunpack.c.l.b16 %v1578
    %v1886 = vunpack.c.h.b16 %v1578
    %v1887 = vunpack.c.l.b16 %v1579
    %v1888 = vunpack.c.l.b16 %v1580
    %v1889 = vunpack.c.h.b16 %v1580
    %v1890 = vunpack.c.l.b16 %v1581
    %v1891 = vunpack.c.h.b16 %v1581
    %v1892 = vunpack.c.l.b16 %v1582
    %v1893 = vunpack.c.h.b16 %v1582
    %v1894 = vunpack.c.l.b16 %v1583
    %v1895 = vunpack.c.l.b16 %v1584
    %v1896 = vunpack.c.h.b16 %v1584
    %v1897 = vunpack.c.l.b16 %v1585
    %v1898 = vunpack.c.h.b16 %v1585
    %v1899 = vunpack.c.l.b16 %v1586
    %v1900 = vunpack.c.h.b16 %v1586
    %v1901 = vunpack.c.l.b16 %v1587
    %v1902 = vunpack.c.l.b16 %v1588
    %v1903 = vunpack.c.h.b16 %v1588
    %v1904 = vunpack.c.l.b16 %v1589
    %v1905 = vunpack.c.h.b16 %v1589
    %v1906 = vunpack.c.l.b16 %v1590
    %v1907 = vunpack.c.h.b16 %v1590
    %v1908 = vunpack.c.l.b16 %v1591
    %v1909 = vunpack.c.l.b16 %v1592
    %v1910 = vunpack.c.h.b16 %v1592
    %v1911 = vunpack.c.l.b16 %v1593
    %v1912 = vunpack.c.h.b16 %v1593
    %v1913 = vunpack.c.l.b16 %v1594
    %v1914 = vunpack.c.h.b16 %v1594
    %v1915 = vunpack.c.l.b16 %v1595
    %v1916 = vunpack.c.l.b16 %v1596
    %v1917 = vunpack.c.h.b16 %v1596
    %v1918 = vunpack.c.l.b16 %v1597
    %v1919 = vunpack.c.h.b16 %v1597
    %v1920 = vunpack.c.l.b16 %v1598
    %v1921 = vunpack.c.h.b16 %v1598
    %v1922 = vunpack.c.l.b16 %v1599
    %v1923 = vunpack.c.l.b16 %v1600
    %v1924 = vunpack.c.h.b16 %v1600
    %v1925 = vunpack.c.l.b16 %v1601
    %v1926 = vunpack.c.h.b16 %v1601
    %v1927 = vunpack.c.l.b16 %v1602
    %v1928 = vunpack.c.h.b16 %v1602
    %v1929 = vunpack.c.l.b16 %v1603
    %v1930 = vunpack.c.l.b16 %v1604
    %v1931 = vunpack.c.h.b16 %v1604
    %v1932 = vunpack.c.l.b16 %v1605
    %v1933 = vunpack.c.h.b16 %v1605
    %v1934 = vunpack.c.l.b16 %v1606
    %v1935 = vunpack.c.h.b16 %v1606
    %v1936 = vunpack.c.l.b16 %v1607
    %v1937 = vunpack.c.l.b16 %v1608
    %v1938 = vunpack.c.h.b16 %v1608
    %v1939 = vunpack.c.l.b16 %v1609
    %v1940 = vunpack.c.h.b16 %v1609
    %v1941 = vunpack.c.l.b16 %v1610
    %v1942 = vunpack.c.h.b16 %v1610
    %v1943 = vunpack.c.l.b16 %v1611
    %v1944 = vunpack.c.l.b16 %v1612
    %v1945 = vunpack.c.h.b16 %v1612
    %v1946 = vunpack.c.l.b16 %v1613
    %v1947 = vunpack.c.h.b16 %v1613
    %v1948 = vunpack.c.l.b16 %v1614
    %v1949 = vunpack.c.h.b16 %v1614
    %v1950 = vunpack.c.l.b16 %v1615
    %v1951 = vunpack.c.l.b16 %v1616
    %v1952 = vunpack.c.h.b16 %v1616
    %v1953 = vunpack.c.l.b16 %v1617
    %v1954 = vunpack.c.h.b16 %v1617
    %v1955 = vunpack.c.l.b16 %v1618
    %v1956 = vunpack.c.h.b16 %v1618
    %v1957 = vunpack.c.l.b16 %v1619
    %v1958 = vunpack.c.l.b16 %v1620
    %v1959 = vunpack.c.h.b16 %v1620
    %v1960 = vunpack.c.l.b16 %v1621
    %v1961 = vunpack.c.h.b16 %v1621
    %v1962 = vunpack.c.l.b16 %v1622
    %v1963 = vunpack.c.h.b16 %v1622
    %v1964 = vunpack.c.l.b16 %v1623
    %v1965 = vunpack.c.l.b16 %v1624
    %v1966 = vunpack.c.h.b16 %v1624
    %v1967 = vunpack.c.l.b16 %v1625
    %v1968 = vunpack.c.h.b16 %v1625
    %v1969 = vunpack.c.l.b16 %v1626
    %v1970 = vunpack.c.h.b16 %v1626
    %v1971 = vunpack.c.l.b16 %v1627
    %v1972 = vunpack.c.l.b16 %v1628
    %v1973 = vunpack.c.h.b16 %v1628
    %v1974 = vunpack.c.l.b16 %v1629
    %v1975 = vunpack.c.h.b16 %v1629
    %v1976 = vunpack.c.l.b16 %v1630
    %v1977 = vunpack.c.h.b16 %v1630
    %v1978 = vunpack.c.l.b16 %v1631
    %v1979 = vunpack.c.l.b16 %v1632
    %v1980 = vunpack.c.h.b16 %v1632
    %v1981 = vunpack.c.l.b16 %v1633
    %v1982 = vunpack.c.h.b16 %v1633
    %v1983 = vunpack.c.l.b16 %v1634
    %v1984 = vunpack.c.h.b16 %v1634
    %v1985 = vunpack.c.l.b16 %v1635
    %v1986 = vunpack.c.l.b16 %v1636
    %v1987 = vunpack.c.h.b16 %v1636
    %v1988 = vunpack.c.l.b16 %v1637
    %v1989 = vunpack.c.h.b16 %v1637
    %v1990 = vunpack.c.l.b16 %v1638
    %v1991 = vunpack.c.h.b16 %v1638
    %v1992 = vunpack.c.l.b16 %v1639
    %v1993 = vunpack.c.l.b16 %v1640
    %v1994 = vunpack.c.h.b16 %v1640
    %v1995 = vunpack.c.l.b16 %v1641
    %v1996 = vunpack.c.h.b16 %v1641
    %v1997 = vunpack.c.l.b16 %v1642
    %v1998 = vunpack.c.h.b16 %v1642
    %v1999 = vunpack.c.l.b16 %v1643
    %v2000 = vunpack.c.l.b16 %v1644
    %v2001 = vunpack.c.h.b16 %v1644
    %v2002 = vunpack.c.l.b16 %v1645
    %v2003 = vunpack.c.h.b16 %v1645
    %v2004 = vunpack.c.l.b16 %v1646
    %v2005 = vunpack.c.h.b16 %v1646
    %v2006 = vunpack.c.l.b16 %v1647
    %v2007 = vunpack.c.l.b16 %v1648
    %v2008 = vunpack.c.h.b16 %v1648
    %v2009 = vunpack.c.l.b16 %v1649
    %v2010 = vunpack.c.h.b16 %v1649
    %v2011 = vunpack.c.l.b16 %v1650
    %v2012 = vunpack.c.h.b16 %v1650
    %v2013 = vunpack.c.l.b16 %v1651
    %v2014 = vunpack.c.l.b16 %v1652
    %v2015 = vunpack.c.h.b16 %v1652
    %v2016 = vunpack.c.l.b16 %v1653
    %v2017 = vunpack.c.h.b16 %v1653
    %v2018 = vunpack.c.l.b16 %v1654
    %v2019 = vunpack.c.h.b16 %v1654
    %v2020 = vunpack.c.l.b16 %v1655
    %v2021 = vunpack.c.l.b16 %v1656
    %v2022 = vunpack.c.h.b16 %v1656
    %v2023 = vunpack.c.l.b16 %v1657
    %v2024 = vunpack.c.h.b16 %v1657
    %v2025 = vunpack.c.l.b16 %v1658
    %v2026 = vunpack.c.h.b16 %v1658
    %v2027 = vunpack.c.l.b16 %v1659
    %v2028 = vunpack.c.l.b16 %v1660
    %v2029 = vunpack.c.h.b16 %v1660
    %v2030 = vunpack.c.l.b16 %v1661
    %v2031 = vunpack.c.h.b16 %v1661
    %v2032 = vunpack.c.l.b16 %v1662
    %v2033 = vunpack.c.h.b16 %v1662
    %v2034 = vunpack.c.l.b16 %v1663
    %v2035 = vunpack.c.l.b16 %v1664
    %v2036 = vunpack.c.h.b16 %v1664
    %v2037 = vunpack.c.l.b16 %v1665
    %v2038 = vunpack.c.h.b16 %v1665
    %v2039 = vunpack.c.l.b16 %v1666
    %v2040 = vunpack.c.h.b16 %v1666
    %v2041 = vunpack.c.l.b16 %v1667
    %v2042 = vunpack.c.l.b16 %v1668
    %v2043 = vunpack.c.h.b16 %v1668
    %v2044 = vunpack.c.l.b16 %v1669
    %v2045 = vunpack.c.h.b16 %v1669
    %v2046 = vunpack.c.l.b16 %v1670
    %v2047 = vunpack.c.h.b16 %v1670
    %v2048 = vunpack.c.l.b16 %v1671
    %v2049 = vunpack.c.l.b16 %v1672
    %v2050 = vunpack.c.h.b16 %v1672
    %v2051 = vunpack.c.l.b16 %v1673
    %v2052 = vunpack.c.h.b16 %v1673
    %v2053 = vunpack.c.l.b16 %v1674
    %v2054 = vunpack.c.h.b16 %v1674
    %v2055 = vunpack.c.l.b16 %v1675
    %v2056 = vunpack.c.l.b16 %v1676
    %v2057 = vunpack.c.h.b16 %v1676
    %v2058 = vunpack.c.l.b16 %v1677
    %v2059 = vunpack.c.h.b16 %v1677
    %v2060 = vunpack.c.l.b16 %v1678
    %v2061 = vunpack.c.h.b16 %v1678
    %v2062 = vunpack.c.l.b16 %v1679
    %v2063 = vunpack.c.l.b16 %v1680
    %v2064 = vunpack.c.h.b16 %v1680
    %v2065 = vunpack.c.l.b16 %v1681
    %v2066 = vunpack.c.h.b16 %v1681
    %v2067 = vunpack.c.l.b16 %v1682
    %v2068 = vunpack.c.h.b16 %v1682
    %v2069 = vunpack.c.l.b16 %v1683
    %v2070 = vunpack.c.l.b16 %v1684
    %v2071 = vunpack.c.h.b16 %v1684
    %v2072 = vunpack.c.l.b16 %v1685
    %v2073 = vunpack.c.h.b16 %v1685
    %v2074 = vunpack.c.l.b16 %v1686
    %v2075 = vunpack.c.h.b16 %v1686
    %v2076 = vunpack.c.l.b16 %v1687
    %v2077 = vpack.c.b16 %v1860, %v1853
    %v2078 = vpack.c.b16 %v1861, %v1854
    %v2079 = vpack.c.b16 %v1862, %v1855
    %v2080 = vpack.c.b16 %v1863, %v1856
    %v2081 = vpack.c.b16 %v1864, %v1857
    %v2082 = vpack.c.b16 %v1865, %v1858
    %v2083 = vpack.c.b16 %v1866, %v1859
    %v2084 = vpack.c.b16 %v1874, %v1867
    %v2085 = vpack.c.b16 %v1875, %v1868
    %v2086 = vpack.c.b16 %v1876, %v1869
    %v2087 = vpack.c.b16 %v1877, %v1870
    %v2088 = vpack.c.b16 %v1878, %v1871
    %v2089 = vpack.c.b16 %v1879, %v1872
    %v2090 = vpack.c.b16 %v1880, %v1873
    %v2091 = vpack.c.b16 %v1888, %v1881
    %v2092 = vpack.c.b16 %v1889, %v1882
    %v2093 = vpack.c.b16 %v1890, %v1883
    %v2094 = vpack.c.b16 %v1891, %v1884
    %v2095 = vpack.c.b16 %v1892, %v1885
    %v2096 = vpack.c.b16 %v1893, %v1886
    %v2097 = vpack.c.b16 %v1894, %v1887
    %v2098 = vpack.c.b16 %v1902, %v1895
    %v2099 = vpack.c.b16 %v1903, %v1896
    %v2100 = vpack.c.b16 %v1904, %v1897
    %v2101 = vpack.c.b16 %v1905, %v1898
    %v2102 = vpack.c.b16 %v1906, %v1899
    %v2103 = vpack.c.b16 %v1907, %v1900
    %v2104 = vpack.c.b16 %v1908, %v1901
    %v2105 = vpack.c.b16 %v1916, %v1909
    %v2106 = vpack.c.b16 %v1917, %v1910
    %v2107 = vpack.c.b16 %v1918, %v1911
    %v2108 = vpack.c.b16 %v1919, %v1912
    %v2109 = vpack.c.b16 %v1920, %v1913
    %v2110 = vpack.c.b16 %v1921, %v1914
    %v2111 = vpack.c.b16 %v1922, %v1915
    %v2112 = vpack.c.b16 %v1930, %v1923
    %v2113 = vpack.c.b16 %v1931, %v1924
    %v2114 = vpack.c.b16 %v1932, %v1925
    %v2115 = vpack.c.b16 %v1933, %v1926
    %v2116 = vpack.c.b16 %v1934, %v1927
    %v2117 = vpack.c.b16 %v1935, %v1928
    %v2118 = vpack.c.b16 %v1936, %v1929
    %v2119 = vpack.c.b16 %v1944, %v1937
    %v2120 = vpack.c.b16 %v1945, %v1938
    %v2121 = vpack.c.b16 %v1946, %v1939
    %v2122 = vpack.c.b16 %v1947, %v1940
    %v2123 = vpack.c.b16 %v1948, %v1941
    %v2124 = vpack.c.b16 %v1949, %v1942
    %v2125 = vpack.c.b16 %v1950, %v1943
    %v2126 = vpack.c.b16 %v1958, %v1951
    %v2127 = vpack.c.b16 %v1959, %v1952
    %v2128 = vpack.c.b16 %v1960, %v1953
    %v2129 = vpack.c.b16 %v1961, %v1954
    %v2130 = vpack.c.b16 %v1962, %v1955
    %v2131 = vpack.c.b16 %v1963, %v1956
    %v2132 = vpack.c.b16 %v1964, %v1957
    %v2133 = vpack.c.b16 %v1972, %v1965
    %v2134 = vpack.c.b16 %v1973, %v1966
    %v2135 = vpack.c.b16 %v1974, %v1967
    %v2136 = vpack.c.b16 %v1975, %v1968
    %v2137 = vpack.c.b16 %v1976, %v1969
    %v2138 = vpack.c.b16 %v1977, %v1970
    %v2139 = vpack.c.b16 %v1978, %v1971
    %v2140 = vpack.c.b16 %v1986, %v1979
    %v2141 = vpack.c.b16 %v1987, %v1980
    %v2142 = vpack.c.b16 %v1988, %v1981
    %v2143 = vpack.c.b16 %v1989, %v1982
    %v2144 = vpack.c.b16 %v1990, %v1983
    %v2145 = vpack.c.b16 %v1991, %v1984
    %v2146 = vpack.c.b16 %v1992, %v1985
    %v2147 = vpack.c.b16 %v2000, %v1993
    %v2148 = vpack.c.b16 %v2001, %v1994
    %v2149 = vpack.c.b16 %v2002, %v1995
    %v2150 = vpack.c.b16 %v2003, %v1996
    %v2151 = vpack.c.b16 %v2004, %v1997
    %v2152 = vpack.c.b16 %v2005, %v1998
    %v2153 = vpack.c.b16 %v2006, %v1999
    %v2154 = vpack.c.b16 %v2014, %v2007
    %v2155 = vpack.c.b16 %v2015, %v2008
    %v2156 = vpack.c.b16 %v2016, %v2009
    %v2157 = vpack.c.b16 %v2017, %v2010
    %v2158 = vpack.c.b16 %v2018, %v2011
    %v2159 = vpack.c.b16 %v2019, %v2012
    %v2160 = vpack.c.b16 %v2020, %v2013
    %v2161 = vpack.c.b16 %v2028, %v2021
    %v2162 = vpack.c.b16 %v2029, %v2022
    %v2163 = vpack.c.b16 %v2030, %v2023
    %v2164 = vpack.c.b16 %v2031, %v2024
    %v2165 = vpack.c.b16 %v2032, %v2025
    %v2166 = vpack.c.b16 %v2033, %v2026
    %v2167 = vpack.c.b16 %v2034, %v2027
    %v2168 = vpack.c.b16 %v2042, %v2035
    %v2169 = vpack.c.b16 %v2043, %v2036
    %v2170 = vpack.c.b16 %v2044, %v2037
    %v2171 = vpack.c.b16 %v2045, %v2038
    %v2172 = vpack.c.b16 %v2046, %v2039
    %v2173 = vpack.c.b16 %v2047, %v2040
    %v2174 = vpack.c.b16 %v2048, %v2041
    %v2175 = vpack.c.b16 %v2056, %v2049
    %v2176 = vpack.c.b16 %v2057, %v2050
    %v2177 = vpack.c.b16 %v2058, %v2051
    %v2178 = vpack.c.b16 %v2059, %v2052
    %v2179 = vpack.c.b16 %v2060, %v2053
    %v2180 = vpack.c.b16 %v2061, %v2054
    %v2181 = vpack.c.b16 %v2062, %v2055
    %v2182 = vpack.c.b16 %v2070, %v2063
    %v2183 = vpack.c.b16 %v2071, %v2064
    %v2184 = vpack.c.b16 %v2072, %v2065
    %v2185 = vpack.c.b16 %v2073, %v2066
    %v2186 = vpack.c.b16 %v2074, %v2067
    %v2187 = vpack.c.b16 %v2075, %v2068
    %v2188 = vpack.c.b16 %v2076, %v2069
    %2301 = vmatprep.subr.bf16.mxu0 %v2078
    %2302 = vmatpush1.bf16.msra.mxu0 %v2077
    %2303 = vmatprep.subr.bf16.mxu0 %v2085
    %2304 = vmatpush1.bf16.msra.mxu0 %v2084
    %2305 = vmatprep.subr.bf16.mxu0 %v2092
    %2306 = vmatpush1.bf16.msra.mxu0 %v2091
    %2307 = vmatprep.subr.bf16.mxu0 %v2099
    %2308 = vmatpush1.bf16.msra.mxu0 %v2098
    %2309 = vmatprep.subr.bf16.mxu0 %v2106
    %2310 = vmatpush1.bf16.msra.mxu0 %v2105
    %2311 = vmatprep.subr.bf16.mxu0 %v2113
    %2312 = vmatpush1.bf16.msra.mxu0 %v2112
    %2313 = vmatprep.subr.bf16.mxu0 %v2120
    %2314 = vmatpush1.bf16.msra.mxu0 %v2119
    %2315 = vmatprep.subr.bf16.mxu0 %v2127
    %2316 = vmatpush1.bf16.msra.mxu0 %v2126
    %2317 = vmatprep.subr.bf16.mxu0 %v2134
    %2318 = vmatpush1.bf16.msra.mxu0 %v2133
    %2319 = vmatprep.subr.bf16.mxu0 %v2141
    %2320 = vmatpush1.bf16.msra.mxu0 %v2140
    %2321 = vmatprep.subr.bf16.mxu0 %v2148
    %2322 = vmatpush1.bf16.msra.mxu0 %v2147
    %2323 = vmatprep.subr.bf16.mxu0 %v2155
    %2324 = vmatpush1.bf16.msra.mxu0 %v2154
    %2325 = vmatprep.subr.bf16.mxu0 %v2162
    %2326 = vmatpush1.bf16.msra.mxu0 %v2161
    %2327 = vmatprep.subr.bf16.mxu0 %v2169
    %2328 = vmatpush1.bf16.msra.mxu0 %v2168
    %2329 = vmatprep.subr.bf16.mxu0 %v2176
    %2330 = vmatpush1.bf16.msra.mxu0 %v2175
    %2331 = vmatprep.subr.bf16.mxu0 %v2183
    %2332 = vmatpush1.bf16.msra.mxu0 %v2182
    %2333 = vmatprep.mubr.bf16.mxu0 %v1555
    %2334 = vmatmul.mubr.bf16.gmra.mrb[0].mxu0 %v1554
    %v2335 = vpop.f32.mrb[0].mxu0
    %v2336 = vadd.f32 %v1693, %v2335
    %v2337 = vpop.f32.mrb[0].mxu0
    %v2338 = vadd.f32 %v1697, %v2337
    %v2339 = vpop.f32.mrb[0].mxu0
    %v2340 = vadd.f32 %v1693, %v2339
    %v2341 = vpop.f32.mrb[0].mxu0
    %v2342 = vadd.f32 %v1697, %v2341
    %2343 = vmatprep.mubr.bf16.mxu0 %v1557
    %2344 = vmatmul.mubr.bf16.gmra.mrb[0].mxu0 %v1556
    %v2345 = vpop.f32.mrb[0].mxu0
    %v2346 = vadd.f32 %v1693, %v2345
    %v2347 = vpop.f32.mrb[0].mxu0
    %v2348 = vadd.f32 %v1697, %v2347
    %v2349 = vpop.f32.mrb[0].mxu0
    %v2350 = vadd.f32 %v1693, %v2349
    %v2351 = vpop.f32.mrb[0].mxu0
    %v2352 = vadd.f32 %v1697, %v2351
    %2353 = vmatprep.mubr.bf16.mxu0 %v1559
    %2354 = vmatmul.mubr.bf16.gmra.mrb[0].mxu0 %v1558
    %v2355 = vpop.f32.mrb[0].mxu0
    %v2356 = vadd.f32 %v1693, %v2355
    %v2357 = vpop.f32.mrb[0].mxu0
    %v2358 = vadd.f32 %v1697, %v2357
    %v2359 = vpop.f32.mrb[0].mxu0
    %v2360 = vpop.f32.mrb[0].mxu0
    %2361 = vdwg.mxu0
    %2362 = vmatprep.subr.bf16.mxu0 %v2080
    %2363 = vmatpush1.bf16.msra.mxu0 %v2079
    %2364 = vmatprep.subr.bf16.mxu0 %v2087
    %2365 = vmatpush1.bf16.msra.mxu0 %v2086
    %2366 = vmatprep.subr.bf16.mxu0 %v2094
    %2367 = vmatpush1.bf16.msra.mxu0 %v2093
    %2368 = vmatprep.subr.bf16.mxu0 %v2101
    %2369 = vmatpush1.bf16.msra.mxu0 %v2100
    %2370 = vmatprep.subr.bf16.mxu0 %v2108
    %2371 = vmatpush1.bf16.msra.mxu0 %v2107
    %2372 = vmatprep.subr.bf16.mxu0 %v2115
    %2373 = vmatpush1.bf16.msra.mxu0 %v2114
    %2374 = vmatprep.subr.bf16.mxu0 %v2122
    %2375 = vmatpush1.bf16.msra.mxu0 %v2121
    %2376 = vmatprep.subr.bf16.mxu0 %v2129
    %2377 = vmatpush1.bf16.msra.mxu0 %v2128
    %2378 = vmatprep.subr.bf16.mxu0 %v2136
    %2379 = vmatpush1.bf16.msra.mxu0 %v2135
    %2380 = vmatprep.subr.bf16.mxu0 %v2143
    %2381 = vmatpush1.bf16.msra.mxu0 %v2142
    %2382 = vmatprep.subr.bf16.mxu0 %v2150
    %2383 = vmatpush1.bf16.msra.mxu0 %v2149
    %2384 = vmatprep.subr.bf16.mxu0 %v2157
    %2385 = vmatpush1.bf16.msra.mxu0 %v2156
    %2386 = vmatprep.subr.bf16.mxu0 %v2164
    %2387 = vmatpush1.bf16.msra.mxu0 %v2163
    %2388 = vmatprep.subr.bf16.mxu0 %v2171
    %2389 = vmatpush1.bf16.msra.mxu0 %v2170
    %2390 = vmatprep.subr.bf16.mxu0 %v2178
    %2391 = vmatpush1.bf16.msra.mxu0 %v2177
    %2392 = vmatprep.subr.bf16.mxu0 %v2185
    %2393 = vmatpush1.bf16.msra.mxu0 %v2184
    %2394 = vmatprep.mubr.bf16.mxu0 %v1555
    %2395 = vmatmul.mubr.bf16.gmra.mrb[0].mxu0 %v1554
    %v2396 = vpop.f32.mrb[0].mxu0
    %v2397 = vadd.f32 %v1701, %v2396
    %v2398 = vpop.f32.mrb[0].mxu0
    %v2399 = vadd.f32 %v1705, %v2398
    %v2400 = vpop.f32.mrb[0].mxu0
    %v2401 = vadd.f32 %v1701, %v2400
    %v2402 = vpop.f32.mrb[0].mxu0
    %v2403 = vadd.f32 %v1705, %v2402
    %2404 = vmatprep.mubr.bf16.mxu0 %v1557
    %2405 = vmatmul.mubr.bf16.gmra.mrb[0].mxu0 %v1556
    %v2406 = vpop.f32.mrb[0].mxu0
    %v2407 = vadd.f32 %v1701, %v2406
    %v2408 = vpop.f32.mrb[0].mxu0
    %v2409 = vadd.f32 %v1705, %v2408
    %v2410 = vpop.f32.mrb[0].mxu0
    %v2411 = vadd.f32 %v1701, %v2410
    %v2412 = vpop.f32.mrb[0].mxu0
    %v2413 = vadd.f32 %v1705, %v2412
    %2414 = vmatprep.mubr.bf16.mxu0 %v1559
    %2415 = vmatmul.mubr.bf16.gmra.mrb[0].mxu0 %v1558
    %v2416 = vpop.f32.mrb[0].mxu0
    %v2417 = vadd.f32 %v1701, %v2416
    %v2418 = vpop.f32.mrb[0].mxu0
    %v2419 = vadd.f32 %v1705, %v2418
    %v2420 = vpop.f32.mrb[0].mxu0
    %v2421 = vpop.f32.mrb[0].mxu0
    %2422 = vdwg.mxu0
    %2423 = vmatprep.subr.bf16.mxu0 %v2082
    %2424 = vmatpush1.bf16.msra.mxu0 %v2081
    %2425 = vmatprep.subr.bf16.mxu0 %v2089
    %2426 = vmatpush1.bf16.msra.mxu0 %v2088
    %2427 = vmatprep.subr.bf16.mxu0 %v2096
    %2428 = vmatpush1.bf16.msra.mxu0 %v2095
    %2429 = vmatprep.subr.bf16.mxu0 %v2103
    %2430 = vmatpush1.bf16.msra.mxu0 %v2102
    %2431 = vmatprep.subr.bf16.mxu0 %v2110
    %2432 = vmatpush1.bf16.msra.mxu0 %v2109
    %2433 = vmatprep.subr.bf16.mxu0 %v2117
    %2434 = vmatpush1.bf16.msra.mxu0 %v2116
    %2435 = vmatprep.subr.bf16.mxu0 %v2124
    %2436 = vmatpush1.bf16.msra.mxu0 %v2123
    %2437 = vmatprep.subr.bf16.mxu0 %v2131
    %2438 = vmatpush1.bf16.msra.mxu0 %v2130
    %2439 = vmatprep.subr.bf16.mxu0 %v2138
    %2440 = vmatpush1.bf16.msra.mxu0 %v2137
    %2441 = vmatprep.subr.bf16.mxu0 %v2145
    %2442 = vmatpush1.bf16.msra.mxu0 %v2144
    %2443 = vmatprep.subr.bf16.mxu0 %v2152
    %2444 = vmatpush1.bf16.msra.mxu0 %v2151
    %2445 = vmatprep.subr.bf16.mxu0 %v2159
    %2446 = vmatpush1.bf16.msra.mxu0 %v2158
    %2447 = vmatprep.subr.bf16.mxu0 %v2166
    %2448 = vmatpush1.bf16.msra.mxu0 %v2165
    %2449 = vmatprep.subr.bf16.mxu0 %v2173
    %2450 = vmatpush1.bf16.msra.mxu0 %v2172
    %2451 = vmatprep.subr.bf16.mxu0 %v2180
    %2452 = vmatpush1.bf16.msra.mxu0 %v2179
    %2453 = vmatprep.subr.bf16.mxu0 %v2187
    %2454 = vmatpush1.bf16.msra.mxu0 %v2186
    %2455 = vmatprep.mubr.bf16.mxu0 %v1555
    %2456 = vmatmul.mubr.bf16.gmra.mrb[0].mxu0 %v1554
    %v2457 = vpop.f32.mrb[0].mxu0
    %v2458 = vadd.f32 %v1709, %v2457
    %v2459 = vpop.f32.mrb[0].mxu0
    %v2460 = vadd.f32 %v1713, %v2459
    %v2461 = vpop.f32.mrb[0].mxu0
    %v2462 = vadd.f32 %v1709, %v2461
    %v2463 = vpop.f32.mrb[0].mxu0
    %v2464 = vadd.f32 %v1713, %v2463
    %2465 = vmatprep.mubr.bf16.mxu0 %v1557
    %2466 = vmatmul.mubr.bf16.gmra.mrb[0].mxu0 %v1556
    %v2467 = vpop.f32.mrb[0].mxu0
    %v2468 = vadd.f32 %v1709, %v2467
    %v2469 = vpop.f32.mrb[0].mxu0
    %v2470 = vadd.f32 %v1713, %v2469
    %v2471 = vpop.f32.mrb[0].mxu0
    %v2472 = vadd.f32 %v1709, %v2471
    %v2473 = vpop.f32.mrb[0].mxu0
    %v2474 = vadd.f32 %v1713, %v2473
    %2475 = vmatprep.mubr.bf16.mxu0 %v1559
    %2476 = vmatmul.mubr.bf16.gmra.mrb[0].mxu0 %v1558
    %v2477 = vpop.f32.mrb[0].mxu0
    %v2478 = vadd.f32 %v1709, %v2477
    %v2479 = vpop.f32.mrb[0].mxu0
    %v2480 = vadd.f32 %v1713, %v2479
    %v2481 = vpop.f32.mrb[0].mxu0
    %v2482 = vpop.f32.mrb[0].mxu0
    %2483 = vdwg.mxu0
    %2484 = vmatprep.subr.bf16.mxu0 0
    %2485 = vmatpush1.bf16.msra.mxu0 %v2083
    %2486 = vmatprep.subr.bf16.mxu0 0
    %2487 = vmatpush1.bf16.msra.mxu0 %v2090
    %2488 = vmatprep.subr.bf16.mxu0 0
    %2489 = vmatpush1.bf16.msra.mxu0 %v2097
    %2490 = vmatprep.subr.bf16.mxu0 0
    %2491 = vmatpush1.bf16.msra.mxu0 %v2104
    %2492 = vmatprep.subr.bf16.mxu0 0
    %2493 = vmatpush1.bf16.msra.mxu0 %v2111
    %2494 = vmatprep.subr.bf16.mxu0 0
    %2495 = vmatpush1.bf16.msra.mxu0 %v2118
    %2496 = vmatprep.subr.bf16.mxu0 0
    %2497 = vmatpush1.bf16.msra.mxu0 %v2125
    %2498 = vmatprep.subr.bf16.mxu0 0
    %2499 = vmatpush1.bf16.msra.mxu0 %v2132
    %2500 = vmatprep.subr.bf16.mxu0 0
    %2501 = vmatpush1.bf16.msra.mxu0 %v2139
    %2502 = vmatprep.subr.bf16.mxu0 0
    %2503 = vmatpush1.bf16.msra.mxu0 %v2146
    %2504 = vmatprep.subr.bf16.mxu0 0
    %2505 = vmatpush1.bf16.msra.mxu0 %v2153
    %2506 = vmatprep.subr.bf16.mxu0 0
    %2507 = vmatpush1.bf16.msra.mxu0 %v2160
    %2508 = vmatprep.subr.bf16.mxu0 0
    %2509 = vmatpush1.bf16.msra.mxu0 %v2167
    %2510 = vmatprep.subr.bf16.mxu0 0
    %2511 = vmatpush1.bf16.msra.mxu0 %v2174
    %2512 = vmatprep.subr.bf16.mxu0 0
    %2513 = vmatpush1.bf16.msra.mxu0 %v2181
    %2514 = vmatprep.subr.bf16.mxu0 0
    %2515 = vmatpush1.bf16.msra.mxu0 %v2188
    %2516 = vmatprep.mubr.bf16.mxu0 %v1555
    %2517 = vmatmul.mubr.bf16.gmra.mrb[0].mxu0 %v1554
    %v2518 = vpop.f32.mrb[0].mxu0
    %v2519 = vadd.f32 %v1717, %v2518
    %v2520 = vpop.f32.mrb[0].mxu0
    %v2521 = vpop.f32.mrb[0].mxu0
    %v2522 = vadd.f32 %v1717, %v2521
    %v2523 = vpop.f32.mrb[0].mxu0
    %2524 = vmatprep.mubr.bf16.mxu0 %v1557
    %2525 = vmatmul.mubr.bf16.gmra.mrb[0].mxu0 %v1556
    %v2526 = vpop.f32.mrb[0].mxu0
    %v2527 = vadd.f32 %v1717, %v2526
    %v2528 = vpop.f32.mrb[0].mxu0
    %v2529 = vpop.f32.mrb[0].mxu0
    %v2530 = vadd.f32 %v1717, %v2529
    %v2531 = vpop.f32.mrb[0].mxu0
    %2532 = vmatprep.mubr.bf16.mxu0 %v1559
    %2533 = vmatmul.mubr.bf16.gmra.mrb[0].mxu0 %v1558
    %v2534 = vpop.f32.mrb[0].mxu0
    %v2535 = vadd.f32 %v1717, %v2534
    %v2536 = vpop.f32.mrb[0].mxu0
    %v2537 = vpop.f32.mrb[0].mxu0
    %v2538 = vpop.f32.mrb[0].mxu0
    %2539 = vdwg.mxu0
    %v2540 = vmul.f32 %v2336, 0.5
    %v2541 = vmul.f32 %v2338, 0.5
    %v2542 = vmul.f32 %v2397, 0.5
    %v2543 = vmul.f32 %v2399, 0.5
    %v2544 = vmul.f32 %v2458, 0.5
    %v2545 = vmul.f32 %v2460, 0.5
    %v2546 = vmul.f32 %v2519, 0.5
    %v2547 = vmul.f32 %v2340, 0.5
    %v2548 = vmul.f32 %v2342, 0.5
    %v2549 = vmul.f32 %v2401, 0.5
    %v2550 = vmul.f32 %v2403, 0.5
    %v2551 = vmul.f32 %v2462, 0.5
    %v2552 = vmul.f32 %v2464, 0.5
    %v2553 = vmul.f32 %v2522, 0.5
    %v2554 = vmul.f32 %v2346, 0.5
    %v2555 = vmul.f32 %v2348, 0.5
    %v2556 = vmul.f32 %v2407, 0.5
    %v2557 = vmul.f32 %v2409, 0.5
    %v2558 = vmul.f32 %v2468, 0.5
    %v2559 = vmul.f32 %v2470, 0.5
    %v2560 = vmul.f32 %v2527, 0.5
    %v2561 = vmul.f32 %v2350, 0.5
    %v2562 = vmul.f32 %v2352, 0.5
    %v2563 = vmul.f32 %v2411, 0.5
    %v2564 = vmul.f32 %v2413, 0.5
    %v2565 = vmul.f32 %v2472, 0.5
    %v2566 = vmul.f32 %v2474, 0.5
    %v2567 = vmul.f32 %v2530, 0.5
    %v2568 = vmul.f32 %v2356, 0.5
    %v2569 = vmul.f32 %v2358, 0.5
    %v2570 = vmul.f32 %v2417, 0.5
    %v2571 = vmul.f32 %v2419, 0.5
    %v2572 = vmul.f32 %v2478, 0.5
    %v2573 = vmul.f32 %v2480, 0.5
    %v2574 = vmul.f32 %v2535, 0.5
    %v2575 = vtanh.pop %v2540
    %v2576 = vtanh.pop %v2541
    %v2577 = vtanh.pop %v2542
    %v2578 = vtanh.pop %v2543
    %v2579 = vtanh.pop %v2544
    %v2580 = vtanh.pop %v2545
    %v2581 = vtanh.pop %v2546
    %v2582 = vtanh.pop %v2547
    %v2583 = vtanh.pop %v2548
    %v2584 = vtanh.pop %v2549
    %v2585 = vtanh.pop %v2550
    %v2586 = vtanh.pop %v2551
    %v2587 = vtanh.pop %v2552
    %v2588 = vtanh.pop %v2553
    %v2589 = vtanh.pop %v2554
    %v2590 = vtanh.pop %v2555
    %v2591 = vtanh.pop %v2556
    %v2592 = vtanh.pop %v2557
    %v2593 = vtanh.pop %v2558
    %v2594 = vtanh.pop %v2559
    %v2595 = vtanh.pop %v2560
    %v2596 = vtanh.pop %v2561
    %v2597 = vtanh.pop %v2562
    %v2598 = vtanh.pop %v2563
    %v2599 = vtanh.pop %v2564
    %v2600 = vtanh.pop %v2565
    %v2601 = vtanh.pop %v2566
    %v2602 = vtanh.pop %v2567
    %v2603 = vtanh.pop %v2568
    %v2604 = vtanh.pop %v2569
    %v2605 = vtanh.pop %v2570
    %v2606 = vtanh.pop %v2571
    %v2607 = vtanh.pop %v2572
    %v2608 = vtanh.pop %v2573
    %v2609 = vtanh.pop %v2574
    %v2610 = vadd.f32 %v2575, 1.0
    %v2611 = vadd.f32 %v2576, 1.0
    %v2612 = vadd.f32 %v2577, 1.0
    %v2613 = vadd.f32 %v2578, 1.0
    %v2614 = vadd.f32 %v2579, 1.0
    %v2615 = vadd.f32 %v2580, 1.0
    %v2616 = vadd.f32 %v2581, 1.0
    %v2617 = vadd.f32 %v2582, 1.0
    %v2618 = vadd.f32 %v2583, 1.0
    %v2619 = vadd.f32 %v2584, 1.0
    %v2620 = vadd.f32 %v2585, 1.0
    %v2621 = vadd.f32 %v2586, 1.0
    %v2622 = vadd.f32 %v2587, 1.0
    %v2623 = vadd.f32 %v2588, 1.0
    %v2624 = vadd.f32 %v2589, 1.0
    %v2625 = vadd.f32 %v2590, 1.0
    %v2626 = vadd.f32 %v2591, 1.0
    %v2627 = vadd.f32 %v2592, 1.0
    %v2628 = vadd.f32 %v2593, 1.0
    %v2629 = vadd.f32 %v2594, 1.0
    %v2630 = vadd.f32 %v2595, 1.0
    %v2631 = vadd.f32 %v2596, 1.0
    %v2632 = vadd.f32 %v2597, 1.0
    %v2633 = vadd.f32 %v2598, 1.0
    %v2634 = vadd.f32 %v2599, 1.0
    %v2635 = vadd.f32 %v2600, 1.0
    %v2636 = vadd.f32 %v2601, 1.0
    %v2637 = vadd.f32 %v2602, 1.0
    %v2638 = vadd.f32 %v2603, 1.0
    %v2639 = vadd.f32 %v2604, 1.0
    %v2640 = vadd.f32 %v2605, 1.0
    %v2641 = vadd.f32 %v2606, 1.0
    %v2642 = vadd.f32 %v2607, 1.0
    %v2643 = vadd.f32 %v2608, 1.0
    %v2644 = vadd.f32 %v2609, 1.0
    %v2645 = vmul.f32 %v2610, 0.5
    %v2646 = vmul.f32 %v2611, 0.5
    %v2647 = vmul.f32 %v2612, 0.5
    %v2648 = vmul.f32 %v2613, 0.5
    %v2649 = vmul.f32 %v2614, 0.5
    %v2650 = vmul.f32 %v2615, 0.5
    %v2651 = vmul.f32 %v2616, 0.5
    %v2652 = vmul.f32 %v2617, 0.5
    %v2653 = vmul.f32 %v2618, 0.5
    %v2654 = vmul.f32 %v2619, 0.5
    %v2655 = vmul.f32 %v2620, 0.5
    %v2656 = vmul.f32 %v2621, 0.5
    %v2657 = vmul.f32 %v2622, 0.5
    %v2658 = vmul.f32 %v2623, 0.5
    %v2659 = vmul.f32 %v2624, 0.5
    %v2660 = vmul.f32 %v2625, 0.5
    %v2661 = vmul.f32 %v2626, 0.5
    %v2662 = vmul.f32 %v2627, 0.5
    %v2663 = vmul.f32 %v2628, 0.5
    %v2664 = vmul.f32 %v2629, 0.5
    %v2665 = vmul.f32 %v2630, 0.5
    %v2666 = vmul.f32 %v2631, 0.5
    %v2667 = vmul.f32 %v2632, 0.5
    %v2668 = vmul.f32 %v2633, 0.5
    %v2669 = vmul.f32 %v2634, 0.5
    %v2670 = vmul.f32 %v2635, 0.5
    %v2671 = vmul.f32 %v2636, 0.5
    %v2672 = vmul.f32 %v2637, 0.5
    %v2673 = vmul.f32 %v2638, 0.5
    %v2674 = vmul.f32 %v2639, 0.5
    %v2675 = vmul.f32 %v2640, 0.5
    %v2676 = vmul.f32 %v2641, 0.5
    %v2677 = vmul.f32 %v2642, 0.5
    %v2678 = vmul.f32 %v2643, 0.5
    %v2679 = vmul.f32 %v2644, 0.5
    %2680 = vst [vmem:[#allocation4] sm:$0xff] %v2645
    %2681 = vst [vmem:[#allocation4 + $0x8] sm:$0xff] %v2646
    %2682 = vst [vmem:[#allocation4 + $0x10] sm:$0xff] %v2647
    %2683 = vst [vmem:[#allocation4 + $0x18] sm:$0xff] %v2648
    %2684 = vst [vmem:[#allocation4 + $0x20] sm:$0xff] %v2649
    %2685 = vst [vmem:[#allocation4 + $0x28] sm:$0xff] %v2650
    %2686 = vst.msk [vmem:[#allocation4 + $0x30] sm:$0xff] %vm706, %v2651
    %2687 = vst [vmem:[#allocation4 + $0x38] sm:$0xff] %v2652
    %2688 = vst [vmem:[#allocation4 + $0x40] sm:$0xff] %v2653
    %2689 = vst [vmem:[#allocation4 + $0x48] sm:$0xff] %v2654
    %2690 = vst [vmem:[#allocation4 + $0x50] sm:$0xff] %v2655
    %2691 = vst [vmem:[#allocation4 + $0x58] sm:$0xff] %v2656
    %2692 = vst [vmem:[#allocation4 + $0x60] sm:$0xff] %v2657
    %2693 = vst.msk [vmem:[#allocation4 + $0x68] sm:$0xff] %vm706, %v2658
    %2694 = vst [vmem:[#allocation4 + $0x70] sm:$0xff] %v2659
    %2695 = vst [vmem:[#allocation4 + $0x78] sm:$0xff] %v2660
    %2696 = vst [vmem:[#allocation4 + $0x80] sm:$0xff] %v2661
    %2697 = vst [vmem:[#allocation4 + $0x88] sm:$0xff] %v2662
    %2698 = vst [vmem:[#allocation4 + $0x90] sm:$0xff] %v2663
    %2699 = vst [vmem:[#allocation4 + $0x98] sm:$0xff] %v2664
    %2700 = vst.msk [vmem:[#allocation4 + $0xa0] sm:$0xff] %vm706, %v2665
    %2701 = vst [vmem:[#allocation4 + $0xa8] sm:$0xff] %v2666
    %2702 = vst [vmem:[#allocation4 + $0xb0] sm:$0xff] %v2667
    %2703 = vst [vmem:[#allocation4 + $0xb8] sm:$0xff] %v2668
    %2704 = vst [vmem:[#allocation4 + $0xc0] sm:$0xff] %v2669
    %2705 = vst [vmem:[#allocation4 + $0xc8] sm:$0xff] %v2670
    %2706 = vst [vmem:[#allocation4 + $0xd0] sm:$0xff] %v2671
    %2707 = vst.msk [vmem:[#allocation4 + $0xd8] sm:$0xff] %vm706, %v2672
    %2708 = vst [vmem:[#allocation4 + $0xe0] sm:$0xff] %v2673
    %2709 = vst [vmem:[#allocation4 + $0xe8] sm:$0xff] %v2674
    %2710 = vst [vmem:[#allocation4 + $0xf0] sm:$0xff] %v2675
    %2711 = vst [vmem:[#allocation4 + $0xf8] sm:$0xff] %v2676
    %2712 = vst [vmem:[#allocation4 + $0x100] sm:$0xff] %v2677
    %2713 = vst [vmem:[#allocation4 + $0x108] sm:$0xff] %v2678
    %2714 = vst.msk [vmem:[#allocation4 + $0x110] sm:$0xff] %vm706, %v2679
    // Predicated region
    $region62: #{tpu_custom_call.1} parent=1 // pred_check
      _
    $region63: #{tpu_custom_call.1} parent=1 // pred_check_branch
      %2716 = sbr.rel (0) target = $region65
    $region64: #{tpu_custom_call.1} parent=1 // pred_region
      %s2718 = ssub.s32 32, 32
      %2719 = vsyncadd [#allocation3], %s2718
      %s2721 = sshll.u32 [#allocation2], 4
      %s2722 = int_to_ptr.vmem [resolvable:$true] %s2721
      %2724 = dma.vmem_to_hbm [thread:$0]  %s2722, 32, %s15, [#allocation3]
    $region65: #{tpu_custom_call.1} parent=1 // pred_fallthru
      _
    // Predicated region
    $region66: #{tpu_custom_call.1} parent=1 // pred_check
      _
    $region67: #{tpu_custom_call.1} parent=1 // pred_check_branch
      %2726 = sbr.rel (0) target = $region69
    $region68: #{tpu_custom_call.1} parent=1 // pred_region
      %s2728 = ssub.s32 4480, 4480
      %2729 = vsyncadd [#allocation5], %s2728
      %s2730 = sshll.u32 [#allocation4], 4
      %s2731 = int_to_ptr.vmem [resolvable:$true] %s2730
      %2736 = dma.vmem_to_hbm [thread:$0]  %s2731, 4480, %s16, [#allocation5], 896, 896, 56
    $region69: #{tpu_custom_call.1} parent=1 // pred_fallthru
      _
    // Predicated region
    $region70: #{tpu_custom_call.1} parent=1 // pred_check
      _
    $region71: #{tpu_custom_call.1} parent=1 // pred_check_branch
      %2738 = sbr.rel (0) target = $region73
    $region72: #{tpu_custom_call.1} parent=1 // pred_region
      %2739 = dma.done [#allocation3], 32
    $region73: #{tpu_custom_call.1} parent=1 // pred_fallthru
      _
    // Predicated region
    $region74: #{tpu_custom_call.1} parent=1 // pred_check
      _
    $region75: #{tpu_custom_call.1} parent=1 // pred_check_branch
      %2741 = sbr.rel (0) target = $region77
    $region76: #{tpu_custom_call.1} parent=1 // pred_region
      %2742 = dma.done [#allocation5], 4480
    $region77: #{tpu_custom_call.1} parent=1 // pred_fallthru
      _
    %2743 = vsyncpa [#allocation3], 1
    %2744 = vsyncpa [#allocation5], 1

</llo_original>
